<compile_context>
chip_gen: v7x
topology: tpu7x:2x2x1
jax: 0.10.0
libtpu: 0.0.40
codegen_flags: <defaults>
</compile_context>

<pallas_src>
import math

import jax
import jax.numpy as jnp
from jax import lax
from jax.experimental import pallas as pl
from jax.experimental.pallas import tpu as pltpu


def _leaky_relu(x, slope=0.2):
    # max(x, slope*x) == LeakyReLU_{slope} for 0 < slope < 1: one VPU max
    # instead of compare + select.
    return jnp.maximum(x, slope * x)


def _gcn(adj_t, d, x, w):
    """LeakyReLU_{0.2}( gen_adj(A) @ (x @ W) ) without materializing gen_adj(A).

    adj_t : A^T, pre-transposed in the wrapper (so this is a plain NN matmul).
    d     : rowsum(A)^-0.5, f32, shape (N, 1).
    Identity used: gen_adj(A) @ s == d * (A^T @ (d * s)).
    """
    # x @ W on the MXU; operands in the MXU dtype, f32 accumulation.
    support = jnp.dot(x.astype(w.dtype), w, preferred_element_type=jnp.float32)
    scaled = d * support                                         # f32 VPU
    agg = jnp.dot(adj_t, scaled.astype(adj_t.dtype),
                  preferred_element_type=jnp.float32)            # MXU
    # Dropout (p=0.2) is identity in eval mode.
    # TODO(synk): training-mode dropout omitted (stochastic; eval identity).
    return _leaky_relu(d * agg)


def _l2norm(y, eps=1e-12):
    """Row-wise l2norm, exactly matching the reference: y / (sqrt(sum(y^2)) + eps)."""
    norm = jnp.sqrt(jnp.sum(y * y, axis=-1, keepdims=True)) + eps
    return y / norm   # exact divide (no approx reciprocal), cost at (N, 1) is negligible


def _mmgcn_enc_kernel(text_ref, vis_ref, adjT_t_ref, adjT_v_ref, adjT_a_ref,
                      d_t_ref, d_v_ref, d_a_ref, wt_ref, wv_ref, wa_ref, o_ref):
    Nt = text_ref.shape[0]
    Nv = vis_ref.shape[0]

    text = text_ref[...]   # f32 (residual stays exact; cast to MXU dtype only for the dot)
    vis = vis_ref[...]

    # Stage 1: per-modality GCNs written straight into rows 0 / Nt of the
    # (Na, D) output block -- o_ref doubles as the concatenated all_nodes
    # staging buffer (replaces both the torch.cat and a VMEM scratch).
    o_ref[pl.ds(0, Nt), :] = _gcn(adjT_t_ref[...], d_t_ref[...], text, wt_ref[...])
    o_ref[pl.ds(Nt, Nv), :] = _gcn(adjT_v_ref[...], d_v_ref[...], vis, wv_ref[...])

    # Stage 2: GCN over all nodes (reads the staged rows back out of o_ref).
    concept = _gcn(adjT_a_ref[...], d_a_ref[...], o_ref[...], wa_ref[...])   # (Na, D) f32

    # Stage 3: residual with _x = concat([text, visual], 0) + row-wise l2norm,
    # written straight into the output row offsets (second concat eliminated).
    o_ref[pl.ds(0, Nt), :] = _l2norm(text + concept[0:Nt, :]).astype(o_ref.dtype)
    o_ref[pl.ds(Nt, Nv), :] = _l2norm(vis + concept[Nt:Nt + Nv, :]).astype(o_ref.dtype)


def _padded_vmem_bytes(shape, dtype):
    """Conservative VMEM footprint of one block ((8, 128) tile padding)."""
    dims = list(shape)
    dims[-1] = -(-dims[-1] // 128) * 128
    if len(dims) >= 2:
        dims[-2] = -(-dims[-2] // 8) * 8
    n = 1
    for s in dims:
        n *= s
    return n * jnp.dtype(dtype).itemsize


def mmgcn_enc(text_emb, visual_emb, adj_text, adj_visual, adj_all, params,
              *, mxu_dtype=jnp.bfloat16):
    """Fused, batched MMGCN_Enc forward: one pallas_call, one graph per grid step."""
    w_text, w_visual, w_all = params
    B, Nt, D = text_emb.shape
    _, Nv, _ = visual_emb.shape
    Na = Nt + Nv

    # Keep the pl.ds(Nt, Nv) row-offset writes on (8, 128) tile boundaries.
    # TODO(synk): pad Nt/Nv (and re-index adj_all) for non-multiple-of-8 graphs.
    assert Nt % 8 == 0 and Nv % 8 == 0, "Nt and Nv must be multiples of 8"

    # TODO(synk): this path keeps one whole graph resident in VMEM per grid
    # step (fine for the small-N regime exercised here); very large Na needs a
    # row/K-tiled variant with a (tm, D) f32 accumulator and pl.when init/final.

    def prep_adj(adj):
        # Degree scale of gen_adj in f32 (guarded so a zero-degree node does
        # not poison the output; the reference would give inf/NaN there), plus
        # the adjacency transposed ONCE here in XLA (fused with the MXU-dtype
        # cast) so the kernel's A^T contraction is a plain NN matmul.
        deg = jnp.sum(adj, axis=-1, keepdims=True)
        d = lax.rsqrt(jnp.maximum(deg, 1e-12))
        return jnp.swapaxes(adj, -1, -2).astype(mxu_dtype), d

    adjT_t, d_t = prep_adj(adj_text)
    adjT_v, d_v = prep_adj(adj_visual)
    adjT_a, d_a = prep_adj(adj_all)
    w_t = w_text.astype(mxu_dtype)
    w_v = w_visual.astype(mxu_dtype)
    w_a = w_all.astype(mxu_dtype)

    def per_graph(*dims):
        nd = len(dims)
        return pl.BlockSpec((None,) + dims, lambda b: (b,) + (0,) * nd)

    def shared(*dims):
        nd = len(dims)
        return pl.BlockSpec(dims, lambda b: (0,) * nd)

    emb_dt = text_emb.dtype
    per_step = (
        _padded_vmem_bytes((Nt, D), emb_dt) + _padded_vmem_bytes((Nv, D), emb_dt)
        + _padded_vmem_bytes((Nt, Nt), mxu_dtype) + _padded_vmem_bytes((Nv, Nv), mxu_dtype)
        + _padded_vmem_bytes((Na, Na), mxu_dtype)
        + _padded_vmem_bytes((Nt, 1), jnp.float32) + _padded_vmem_bytes((Nv, 1), jnp.float32)
        + _padded_vmem_bytes((Na, 1), jnp.float32)
        + _padded_vmem_bytes((Na, D), jnp.float32))           # output block
    weight_bytes = 3 * _padded_vmem_bytes((D, D), mxu_dtype)
    # Per-graph blocks + output are double-buffered across grid steps; weights
    # (constant index_map) are fetched once.  Headroom for Mosaic-internal
    # scratch; clamp to 64 MiB so the request is valid on v5e/v6e and v7x.
    vmem_limit = 2 * (per_step + weight_bytes) + (8 << 20)
    vmem_limit = int(max(16 << 20, min(vmem_limit, 64 << 20)))

    return pl.pallas_call(
        _mmgcn_enc_kernel,
        out_shape=jax.ShapeDtypeStruct((B, Na, D), jnp.float32),
        grid=(B,),
        in_specs=[
            per_graph(Nt, D), per_graph(Nv, D),
            per_graph(Nt, Nt), per_graph(Nv, Nv), per_graph(Na, Na),
            per_graph(Nt, 1), per_graph(Nv, 1), per_graph(Na, 1),
            shared(D, D), shared(D, D), shared(D, D),
        ],
        out_specs=per_graph(Na, D),
        compiler_params=pltpu.CompilerParams(
            dimension_semantics=("parallel",),     # batch axis: split across v7x's 2 TCs
            vmem_limit_bytes=vmem_limit),
    )(text_emb, visual_emb, adjT_t, adjT_v, adjT_a, d_t, d_v, d_a, w_t, w_v, w_a)


def init_params(key, graph_embed_size):
    """GraphConvolution.reset_parameters: uniform(-stdv, stdv), stdv=1/sqrt(out)."""
    stdv = 1.0 / math.sqrt(graph_embed_size)
    k1, k2, k3 = jax.random.split(key, 3)
    shape = (graph_embed_size, graph_embed_size)
    w_text = jax.random.uniform(k1, shape, jnp.float32, -stdv, stdv)
    w_visual = jax.random.uniform(k2, shape, jnp.float32, -stdv, stdv)
    w_all = jax.random.uniform(k3, shape, jnp.float32, -stdv, stdv)
    return w_text, w_visual, w_all


def mmgcn_enc_ref(text_emb, visual_emb, adj_text, adj_visual, adj_all, params):
    """Pure-JAX reference (mirrors the PyTorch module, eval mode), vmapped over graphs."""
    w_text, w_visual, w_all = params
    hp = jax.lax.Precision.HIGHEST

    def gen_adj(A):
        d = jnp.power(jnp.sum(A, axis=1), -0.5)
        return d[:, None] * A.T * d[None, :]

    def gc(x, A, w):
        out = jnp.matmul(gen_adj(A), jnp.matmul(x, w, precision=hp), precision=hp)
        return jnp.where(out >= 0, out, 0.2 * out)

    def one_graph(te, vi, at, av, aa):
        _x = jnp.concatenate([te, vi], axis=0)
        all_nodes = jnp.concatenate([gc(te, at, w_text), gc(vi, av, w_visual)], axis=0)
        concept = gc(all_nodes, aa, w_all)
        y = _x + concept
        norm = jnp.sqrt(jnp.sum(y * y, axis=-1, keepdims=True)) + 1e-12
        return y / norm

    return jax.vmap(one_graph)(text_emb, visual_emb, adj_text, adj_visual, adj_all)


if __name__ == "__main__":
    B = 4            # independent graphs batched along the ("parallel") grid axis
    D = 128          # graph_embed_size
    Nt, Nv = 16, 16  # text / visual node counts (multiples of 8 → aligned row writes)
    Na = Nt + Nv

    key = jax.random.PRNGKey(0)
    k_te, k_vi, k_at, k_av, k_aa, k_p = jax.random.split(key, 6)

    text_emb = jax.random.normal(k_te, (B, Nt, D), jnp.float32)
    visual_emb = jax.random.normal(k_vi, (B, Nv, D), jnp.float32)

    def batched_adj(k, n):
        # Positive adjacency with self-loops so rowsum^-0.5 is finite.
        eye = jnp.broadcast_to(jnp.eye(n, dtype=jnp.float32), (B, n, n))
        return jax.random.uniform(k, (B, n, n), jnp.float32) + eye

    adj_text = batched_adj(k_at, Nt)
    adj_visual = batched_adj(k_av, Nv)
    adj_all = batched_adj(k_aa, Na)

    params = init_params(k_p, D)
    ref = mmgcn_enc_ref(text_emb, visual_emb, adj_text, adj_visual, adj_all, params)

    # Full-f32 MXU path: tight check (exact l2norm, no approx reciprocal anymore).
    out_f32 = mmgcn_enc(text_emb, visual_emb, adj_text, adj_visual, adj_all, params,
                        mxu_dtype=jnp.float32)
    out_f32 = jax.block_until_ready(out_f32)
    assert out_f32.shape == (B, Na, D) and out_f32.dtype == jnp.float32
    assert bool(jnp.all(jnp.isfinite(out_f32)))
    assert jnp.allclose(out_f32, ref, rtol=5e-3, atol=5e-3), \
        float(jnp.max(jnp.abs(out_f32 - ref)))

    # Default bf16 MXU operands (halves adjacency HBM/VMEM, doubles MXU rate),
    # f32 accumulation and f32 scaling / activation / residual / l2norm.
    out_bf16 = mmgcn_enc(text_emb, visual_emb, adj_text, adj_visual, adj_all, params)
    out_bf16 = jax.block_until_ready(out_bf16)
    assert out_bf16.shape == (B, Na, D) and out_bf16.dtype == jnp.float32
    assert bool(jnp.all(jnp.isfinite(out_bf16)))
    assert jnp.allclose(out_bf16, ref, rtol=3e-2, atol=3e-2), \
        float(jnp.max(jnp.abs(out_bf16 - ref)))

    print("KERNEL_OK")
</pallas_src>

<mosaic_0001>
module attributes {stable_mosaic.version = 11 : i64} {
  func.func @_mmgcn_enc_kernel(%arg0: i32, %arg1: memref<1x16x128xf32, #tpu.memory_space<vmem>>, %arg2: memref<1x16x128xf32, #tpu.memory_space<vmem>>, %arg3: memref<1x16x16xf32, #tpu.memory_space<vmem>>, %arg4: memref<1x16x16xf32, #tpu.memory_space<vmem>>, %arg5: memref<1x32x32xf32, #tpu.memory_space<vmem>>, %arg6: memref<1x16x1xf32, #tpu.memory_space<vmem>>, %arg7: memref<1x16x1xf32, #tpu.memory_space<vmem>>, %arg8: memref<1x32x1xf32, #tpu.memory_space<vmem>>, %arg9: memref<128x128xf32, #tpu.memory_space<vmem>>, %arg10: memref<128x128xf32, #tpu.memory_space<vmem>>, %arg11: memref<128x128xf32, #tpu.memory_space<vmem>>, %arg12: memref<1x32x128xf32, #tpu.memory_space<vmem>>) attributes {dimension_semantics = [#tpu.dimension_semantics<parallel>], iteration_bounds = array<i64: 4>, scalar_prefetch = 0 : i64, scratch_operands = 0 : i64, tpu.core_type = #tpu.core_type<tc>, window_params = [{transform_indices = @transform_0, window_bounds = array<i64: 1, 16, 128>}, {transform_indices = @transform_1, window_bounds = array<i64: 1, 16, 128>}, {transform_indices = @transform_2, window_bounds = array<i64: 1, 16, 16>}, {transform_indices = @transform_3, window_bounds = array<i64: 1, 16, 16>}, {transform_indices = @transform_4, window_bounds = array<i64: 1, 32, 32>}, {transform_indices = @transform_5, window_bounds = array<i64: 1, 16, 1>}, {transform_indices = @transform_6, window_bounds = array<i64: 1, 16, 1>}, {transform_indices = @transform_7, window_bounds = array<i64: 1, 32, 1>}, {pipeline_mode = #tpu.pipeline_mode<synchronous>, transform_indices = @transform_8, window_bounds = array<i64: 128, 128>}, {pipeline_mode = #tpu.pipeline_mode<synchronous>, transform_indices = @transform_9, window_bounds = array<i64: 128, 128>}, {pipeline_mode = #tpu.pipeline_mode<synchronous>, transform_indices = @transform_10, window_bounds = array<i64: 128, 128>}, {transform_indices = @transform_11, window_bounds = array<i64: 1, 32, 128>}]} {
    %c0 = arith.constant 0 : index
    %c0_0 = arith.constant 0 : index
    %c0_1 = arith.constant 0 : index
    %0 = vector.load %arg1[%c0, %c0_0, %c0_1] : memref<1x16x128xf32, #tpu.memory_space<vmem>>, vector<1x16x128xf32>
    %1 = vector.shape_cast %0 : vector<1x16x128xf32> to vector<16x128xf32>
    %c0_2 = arith.constant 0 : index
    %c0_3 = arith.constant 0 : index
    %c0_4 = arith.constant 0 : index
    %2 = vector.load %arg2[%c0_2, %c0_3, %c0_4] : memref<1x16x128xf32, #tpu.memory_space<vmem>>, vector<1x16x128xf32>
    %3 = vector.shape_cast %2 : vector<1x16x128xf32> to vector<16x128xf32>
    %c0_5 = arith.constant 0 : index
    %c0_6 = arith.constant 0 : index
    %c0_7 = arith.constant 0 : index
    %4 = vector.load %arg3[%c0_5, %c0_6, %c0_7] : memref<1x16x16xf32, #tpu.memory_space<vmem>>, vector<1x16x16xf32>
    %5 = vector.shape_cast %4 : vector<1x16x16xf32> to vector<16x16xf32>
    %c0_8 = arith.constant 0 : index
    %c0_9 = arith.constant 0 : index
    %c0_10 = arith.constant 0 : index
    %6 = vector.load %arg6[%c0_8, %c0_9, %c0_10] : memref<1x16x1xf32, #tpu.memory_space<vmem>>, vector<1x16x1xf32>
    %7 = vector.shape_cast %6 : vector<1x16x1xf32> to vector<16x1xf32>
    %c0_11 = arith.constant 0 : index
    %c0_12 = arith.constant 0 : index
    %8 = vector.load %arg9[%c0_11, %c0_12] : memref<128x128xf32, #tpu.memory_space<vmem>>, vector<128x128xf32>
    %cst = arith.constant dense<0.000000e+00> : vector<16x128xf32>
    %9 = tpu.matmul %1, %8, %cst {dimension_numbers = #tpu.dot_dimension_numbers<[1], [0], [0], [1], [0, 0, 1, 1], [], []>} : vector<16x128xf32>, vector<128x128xf32>, vector<16x128xf32> -> vector<16x128xf32>
    %10 = vector.broadcast %7 : vector<16x1xf32> to vector<16x128xf32>
    %11 = arith.mulf %10, %9 : vector<16x128xf32>
    %cst_13 = arith.constant dense<0.000000e+00> : vector<16x128xf32>
    %12 = tpu.matmul %5, %11, %cst_13 {dimension_numbers = #tpu.dot_dimension_numbers<[1], [0], [0], [1], [0, 0, 1, 1], [], []>} : vector<16x16xf32>, vector<16x128xf32>, vector<16x128xf32> -> vector<16x128xf32>
    %13 = vector.broadcast %7 : vector<16x1xf32> to vector<16x128xf32>
    %14 = arith.mulf %13, %12 : vector<16x128xf32>
    %cst_14 = arith.constant 2.000000e-01 : f32
    %15 = vector.broadcast %cst_14 : f32 to vector<16x128xf32>
    %16 = arith.mulf %15, %14 : vector<16x128xf32>
    %17 = arith.maximumf %14, %16 : vector<16x128xf32>
    %c0_15 = arith.constant 0 : index
    %c0_16 = arith.constant 0 : index
    %c0_17 = arith.constant 0 : index
    %18 = vector.load %arg12[%c0_15, %c0_16, %c0_17] : memref<1x32x128xf32, #tpu.memory_space<vmem>>, vector<1x16x128xf32>
    %19 = vector.shape_cast %18 : vector<1x16x128xf32> to vector<16x128xf32>
    %20 = vector.shape_cast %17 : vector<16x128xf32> to vector<1x16x128xf32>
    tpu.vector_store %arg12[%c0_15, %c0_16, %c0_17], %20 {strides = array<i32>} : memref<1x32x128xf32, #tpu.memory_space<vmem>>, vector<1x16x128xf32>,
    %c0_18 = arith.constant 0 : index
    %c0_19 = arith.constant 0 : index
    %c0_20 = arith.constant 0 : index
    %21 = vector.load %arg4[%c0_18, %c0_19, %c0_20] : memref<1x16x16xf32, #tpu.memory_space<vmem>>, vector<1x16x16xf32>
    %22 = vector.shape_cast %21 : vector<1x16x16xf32> to vector<16x16xf32>
    %c0_21 = arith.constant 0 : index
    %c0_22 = arith.constant 0 : index
    %c0_23 = arith.constant 0 : index
    %23 = vector.load %arg7[%c0_21, %c0_22, %c0_23] : memref<1x16x1xf32, #tpu.memory_space<vmem>>, vector<1x16x1xf32>
    %24 = vector.shape_cast %23 : vector<1x16x1xf32> to vector<16x1xf32>
    %c0_24 = arith.constant 0 : index
    %c0_25 = arith.constant 0 : index
    %25 = vector.load %arg10[%c0_24, %c0_25] : memref<128x128xf32, #tpu.memory_space<vmem>>, vector<128x128xf32>
    %cst_26 = arith.constant dense<0.000000e+00> : vector<16x128xf32>
    %26 = tpu.matmul %3, %25, %cst_26 {dimension_numbers = #tpu.dot_dimension_numbers<[1], [0], [0], [1], [0, 0, 1, 1], [], []>} : vector<16x128xf32>, vector<128x128xf32>, vector<16x128xf32> -> vector<16x128xf32>
    %27 = vector.broadcast %24 : vector<16x1xf32> to vector<16x128xf32>
    %28 = arith.mulf %27, %26 : vector<16x128xf32>
    %cst_27 = arith.constant dense<0.000000e+00> : vector<16x128xf32>
    %29 = tpu.matmul %22, %28, %cst_27 {dimension_numbers = #tpu.dot_dimension_numbers<[1], [0], [0], [1], [0, 0, 1, 1], [], []>} : vector<16x16xf32>, vector<16x128xf32>, vector<16x128xf32> -> vector<16x128xf32>
    %30 = vector.broadcast %24 : vector<16x1xf32> to vector<16x128xf32>
    %31 = arith.mulf %30, %29 : vector<16x128xf32>
    %cst_28 = arith.constant 2.000000e-01 : f32
    %32 = vector.broadcast %cst_28 : f32 to vector<16x128xf32>
    %33 = arith.mulf %32, %31 : vector<16x128xf32>
    %34 = arith.maximumf %31, %33 : vector<16x128xf32>
    %c0_29 = arith.constant 0 : index
    %c16 = arith.constant 16 : index
    %c0_30 = arith.constant 0 : index
    %35 = vector.load %arg12[%c0_29, %c16, %c0_30] : memref<1x32x128xf32, #tpu.memory_space<vmem>>, vector<1x16x128xf32>
    %36 = vector.shape_cast %35 : vector<1x16x128xf32> to vector<16x128xf32>
    %37 = vector.shape_cast %34 : vector<16x128xf32> to vector<1x16x128xf32>
    tpu.vector_store %arg12[%c0_29, %c16, %c0_30], %37 {strides = array<i32>} : memref<1x32x128xf32, #tpu.memory_space<vmem>>, vector<1x16x128xf32>,
    %c0_31 = arith.constant 0 : index
    %c0_32 = arith.constant 0 : index
    %c0_33 = arith.constant 0 : index
    %38 = vector.load %arg5[%c0_31, %c0_32, %c0_33] : memref<1x32x32xf32, #tpu.memory_space<vmem>>, vector<1x32x32xf32>
    %39 = vector.shape_cast %38 : vector<1x32x32xf32> to vector<32x32xf32>
    %c0_34 = arith.constant 0 : index
    %c0_35 = arith.constant 0 : index
    %c0_36 = arith.constant 0 : index
    %40 = vector.load %arg8[%c0_34, %c0_35, %c0_36] : memref<1x32x1xf32, #tpu.memory_space<vmem>>, vector<1x32x1xf32>
    %41 = vector.shape_cast %40 : vector<1x32x1xf32> to vector<32x1xf32>
    %c0_37 = arith.constant 0 : index
    %c0_38 = arith.constant 0 : index
    %c0_39 = arith.constant 0 : index
    %42 = vector.load %arg12[%c0_37, %c0_38, %c0_39] : memref<1x32x128xf32, #tpu.memory_space<vmem>>, vector<1x32x128xf32>
    %43 = vector.shape_cast %42 : vector<1x32x128xf32> to vector<32x128xf32>
    %c0_40 = arith.constant 0 : index
    %c0_41 = arith.constant 0 : index
    %44 = vector.load %arg11[%c0_40, %c0_41] : memref<128x128xf32, #tpu.memory_space<vmem>>, vector<128x128xf32>
    %cst_42 = arith.constant dense<0.000000e+00> : vector<32x128xf32>
    %45 = tpu.matmul %43, %44, %cst_42 {dimension_numbers = #tpu.dot_dimension_numbers<[1], [0], [0], [1], [0, 0, 1, 1], [], []>} : vector<32x128xf32>, vector<128x128xf32>, vector<32x128xf32> -> vector<32x128xf32>
    %46 = vector.broadcast %41 : vector<32x1xf32> to vector<32x128xf32>
    %47 = arith.mulf %46, %45 : vector<32x128xf32>
    %cst_43 = arith.constant dense<0.000000e+00> : vector<32x128xf32>
    %48 = tpu.matmul %39, %47, %cst_43 {dimension_numbers = #tpu.dot_dimension_numbers<[1], [0], [0], [1], [0, 0, 1, 1], [], []>} : vector<32x32xf32>, vector<32x128xf32>, vector<32x128xf32> -> vector<32x128xf32>
    %49 = vector.broadcast %41 : vector<32x1xf32> to vector<32x128xf32>
    %50 = arith.mulf %49, %48 : vector<32x128xf32>
    %cst_44 = arith.constant 2.000000e-01 : f32
    %51 = vector.broadcast %cst_44 : f32 to vector<32x128xf32>
    %52 = arith.mulf %51, %50 : vector<32x128xf32>
    %53 = arith.maximumf %50, %52 : vector<32x128xf32>
    %54 = vector.extract_strided_slice %53 {offsets = [0, 0], sizes = [16, 128], strides = [1, 1]} : vector<32x128xf32> to vector<16x128xf32>
    %55 = arith.addf %1, %54 : vector<16x128xf32>
    %56 = arith.mulf %55, %55 : vector<16x128xf32>
    %cst_45 = arith.constant dense<0.000000e+00> : vector<16xf32>
    %57 = vector.multi_reduction <add>, %56, %cst_45 [1] : vector<16x128xf32> to vector<16xf32>
    %58 = vector.shape_cast %57 : vector<16xf32> to vector<16x1xf32>
    %59 = math.sqrt %58 : vector<16x1xf32>
    %cst_46 = arith.constant 9.99999996E-13 : f32
    %60 = vector.broadcast %cst_46 : f32 to vector<16x1xf32>
    %61 = arith.addf %59, %60 : vector<16x1xf32>
    %62 = vector.broadcast %61 : vector<16x1xf32> to vector<16x128xf32>
    %63 = arith.divf %55, %62 : vector<16x128xf32>
    %c0_47 = arith.constant 0 : index
    %c0_48 = arith.constant 0 : index
    %c0_49 = arith.constant 0 : index
    %64 = vector.load %arg12[%c0_47, %c0_48, %c0_49] : memref<1x32x128xf32, #tpu.memory_space<vmem>>, vector<1x16x128xf32>
    %65 = vector.shape_cast %64 : vector<1x16x128xf32> to vector<16x128xf32>
    %66 = vector.shape_cast %63 : vector<16x128xf32> to vector<1x16x128xf32>
    tpu.vector_store %arg12[%c0_47, %c0_48, %c0_49], %66 {strides = array<i32>} : memref<1x32x128xf32, #tpu.memory_space<vmem>>, vector<1x16x128xf32>,
    %67 = vector.extract_strided_slice %53 {offsets = [16, 0], sizes = [16, 128], strides = [1, 1]} : vector<32x128xf32> to vector<16x128xf32>
    %68 = arith.addf %3, %67 : vector<16x128xf32>
    %69 = arith.mulf %68, %68 : vector<16x128xf32>
    %cst_50 = arith.constant dense<0.000000e+00> : vector<16xf32>
    %70 = vector.multi_reduction <add>, %69, %cst_50 [1] : vector<16x128xf32> to vector<16xf32>
    %71 = vector.shape_cast %70 : vector<16xf32> to vector<16x1xf32>
    %72 = math.sqrt %71 : vector<16x1xf32>
    %cst_51 = arith.constant 9.99999996E-13 : f32
    %73 = vector.broadcast %cst_51 : f32 to vector<16x1xf32>
    %74 = arith.addf %72, %73 : vector<16x1xf32>
    %75 = vector.broadcast %74 : vector<16x1xf32> to vector<16x128xf32>
    %76 = arith.divf %68, %75 : vector<16x128xf32>
    %c0_52 = arith.constant 0 : index
    %c16_53 = arith.constant 16 : index
    %c0_54 = arith.constant 0 : index
    %77 = vector.load %arg12[%c0_52, %c16_53, %c0_54] : memref<1x32x128xf32, #tpu.memory_space<vmem>>, vector<1x16x128xf32>
    %78 = vector.shape_cast %77 : vector<1x16x128xf32> to vector<16x128xf32>
    %79 = vector.shape_cast %76 : vector<16x128xf32> to vector<1x16x128xf32>
    tpu.vector_store %arg12[%c0_52, %c16_53, %c0_54], %79 {strides = array<i32>} : memref<1x32x128xf32, #tpu.memory_space<vmem>>, vector<1x16x128xf32>,
    return
  }
  func.func @transform_0(%arg0: i32) -> (i32, i32, i32) {
    %c0_i32 = arith.constant 0 : i32
    %c0_i32_0 = arith.constant 0 : i32
    %c0_i32_1 = arith.constant 0 : i32
    return %arg0, %c0_i32, %c0_i32_0 : i32, i32, i32
  }
  func.func @transform_1(%arg0: i32) -> (i32, i32, i32) {
    %c0_i32 = arith.constant 0 : i32
    %c0_i32_0 = arith.constant 0 : i32
    %c0_i32_1 = arith.constant 0 : i32
    return %arg0, %c0_i32, %c0_i32_0 : i32, i32, i32
  }
  func.func @transform_2(%arg0: i32) -> (i32, i32, i32) {
    %c0_i32 = arith.constant 0 : i32
    %c0_i32_0 = arith.constant 0 : i32
    %c0_i32_1 = arith.constant 0 : i32
    return %arg0, %c0_i32, %c0_i32_0 : i32, i32, i32
  }
  func.func @transform_3(%arg0: i32) -> (i32, i32, i32) {
    %c0_i32 = arith.constant 0 : i32
    %c0_i32_0 = arith.constant 0 : i32
    %c0_i32_1 = arith.constant 0 : i32
    return %arg0, %c0_i32, %c0_i32_0 : i32, i32, i32
  }
  func.func @transform_4(%arg0: i32) -> (i32, i32, i32) {
    %c0_i32 = arith.constant 0 : i32
    %c0_i32_0 = arith.constant 0 : i32
    %c0_i32_1 = arith.constant 0 : i32
    return %arg0, %c0_i32, %c0_i32_0 : i32, i32, i32
  }
  func.func @transform_5(%arg0: i32) -> (i32, i32, i32) {
    %c0_i32 = arith.constant 0 : i32
    %c0_i32_0 = arith.constant 0 : i32
    %c0_i32_1 = arith.constant 0 : i32
    return %arg0, %c0_i32, %c0_i32_0 : i32, i32, i32
  }
  func.func @transform_6(%arg0: i32) -> (i32, i32, i32) {
    %c0_i32 = arith.constant 0 : i32
    %c0_i32_0 = arith.constant 0 : i32
    %c0_i32_1 = arith.constant 0 : i32
    return %arg0, %c0_i32, %c0_i32_0 : i32, i32, i32
  }
  func.func @transform_7(%arg0: i32) -> (i32, i32, i32) {
    %c0_i32 = arith.constant 0 : i32
    %c0_i32_0 = arith.constant 0 : i32
    %c0_i32_1 = arith.constant 0 : i32
    return %arg0, %c0_i32, %c0_i32_0 : i32, i32, i32
  }
  func.func @transform_8(%arg0: i32) -> (i32, i32) {
    %c0_i32 = arith.constant 0 : i32
    %c0_i32_0 = arith.constant 0 : i32
    %c0_i32_1 = arith.constant 0 : i32
    return %c0_i32, %c0_i32_0 : i32, i32
  }
  func.func @transform_9(%arg0: i32) -> (i32, i32) {
    %c0_i32 = arith.constant 0 : i32
    %c0_i32_0 = arith.constant 0 : i32
    %c0_i32_1 = arith.constant 0 : i32
    return %c0_i32, %c0_i32_0 : i32, i32
  }
  func.func @transform_10(%arg0: i32) -> (i32, i32) {
    %c0_i32 = arith.constant 0 : i32
    %c0_i32_0 = arith.constant 0 : i32
    %c0_i32_1 = arith.constant 0 : i32
    return %c0_i32, %c0_i32_0 : i32, i32
  }
  func.func @transform_11(%arg0: i32) -> (i32, i32, i32) {
    %c0_i32 = arith.constant 0 : i32
    %c0_i32_0 = arith.constant 0 : i32
    %c0_i32_1 = arith.constant 0 : i32
    return %arg0, %c0_i32, %c0_i32_0 : i32, i32, i32
  }
}

</mosaic_0001>

<llo_original>
// kernel: tpu_custom_call.1
$region0: #{tpu_custom_call.1}
  #allocation0 [shape = 'u32[]', space=smem, size = 0x4, offset = 0x4, fixed_abs, tag = 'smem constant byte address 0x4 - core index']
  #allocation1 [shape = 'u32[144,128]{1,0:T(1,128)}', space=vmem, size = 0x12000, scoped, tag = 'internal scratch']
  %s0 = inlined_call_operand.hbm [shape: f32[4,16,128], index: 0, kind: input, shape index: {}]
  %s1 = inlined_call_operand.hbm [shape: f32[4,16,128], index: 1, kind: input, shape index: {}]
  %s2 = inlined_call_operand.hbm [shape: f32[4,16,16], index: 2, kind: input, shape index: {}]
  %s3 = inlined_call_operand.hbm [shape: f32[4,16,16], index: 3, kind: input, shape index: {}]
  %s4 = inlined_call_operand.vmem [shape: f32[4,32,32], index: 4, kind: input, shape index: {}]
  %s5 = inlined_call_operand.vmem [shape: f32[4,16,1], index: 5, kind: input, shape index: {}]
  %s6 = inlined_call_operand.vmem [shape: f32[4,16,1], index: 6, kind: input, shape index: {}]
  %s7 = inlined_call_operand.vmem [shape: f32[4,32,1], index: 7, kind: input, shape index: {}]
  %s8 = inlined_call_operand.vmem [shape: f32[128,128], index: 8, kind: input, shape index: {}]
  %s9 = inlined_call_operand.hbm [shape: f32[128,128], index: 9, kind: input, shape index: {}]
  %s10 = inlined_call_operand.hbm [shape: f32[128,128], index: 10, kind: input, shape index: {}]
  %s11 = inlined_call_operand.hbm [shape: f32[4,32,128], index: 11, kind: output, shape index: {}]
  %s12 = sld [smem:[#allocation0]]
  $region101: #{tpu_custom_call.1} parent=0
    _
  %s14 = ssub.s32 1, %s12
  %s15 = scalar_select 0, %s14, %s12
  $region1: #{tpu_custom_call.1} parent=0
    #allocation2 [shape = 'u8[16384]{0}', space=vmem, size = 0x4000, scoped, tag = 'input window, operand 0']
    #allocation3 [shape = 's32[2]{0}', space=sflag, size = 0x8, scoped, tag = 'scoped memory for tpu_custom_call.1']
    #allocation4 [shape = 's32[2]{0}', space=sflag, size = 0x8, scoped, tag = 'scoped memory for tpu_custom_call.1']
    #allocation5 [shape = 'u8[16384]{0}', space=vmem, size = 0x4000, scoped, tag = 'input window, operand 1']
    #allocation6 [shape = 's32[2]{0}', space=sflag, size = 0x8, scoped, tag = 'scoped memory for tpu_custom_call.1']
    #allocation7 [shape = 'u8[16384]{0}', space=vmem, size = 0x4000, scoped, tag = 'input window, operand 2']
    #allocation8 [shape = 'u8[16384]{0}', space=vmem, size = 0x4000, scoped, tag = 'input window, operand 3']
    #allocation9 [shape = 's32[2]{0}', space=sflag, size = 0x8, scoped, tag = 'scoped memory for tpu_custom_call.1']
    #allocation10 [shape = 'u8[65536]{0}', space=vmem, size = 0x10000, scoped, tag = 'input window, operand 9, single buffered']
    #allocation11 [shape = 'u8[65536]{0}', space=vmem, size = 0x10000, scoped, tag = 'input window, operand 10, single buffered']
    #allocation12 [shape = 's32[1]{0}', space=sflag, size = 0x4, scoped, tag = 'scoped memory for tpu_custom_call.1']
    #allocation13 [shape = 'u8[32768]{0}', space=vmem, size = 0x8000, scoped, tag = 'output window, operand 0']
    %16 = vsyncpa [#allocation3], 0
    %s17 = scalar_lea.sflag [#allocation3], 1
    %18 = vsyncpa %s17, 0
    %19 = vsyncpa [#allocation6], 0
    %s20 = scalar_lea.sflag [#allocation6], 1
    %21 = vsyncpa %s20, 0
    %22 = vsyncpa [#allocation9], 0
    %s23 = scalar_lea.sflag [#allocation9], 1
    %24 = vsyncpa %s23, 0
    %25 = vsyncpa [#allocation12], 0
    %26 = vsyncpa [#allocation4], 0
    %s27 = scalar_lea.sflag [#allocation4], 1
    %28 = vsyncpa %s27, 0
    loop: start=0, step=1, limit=6
    $region2: #{tpu_custom_call.1} parent=1 // loop_pre_header
      _
    $region3: #{tpu_custom_call.1} parent=1 // loop_header
      %s30 = sphi 0, %s34
      %p31 = scmp.ge.s32.totalorder %s30, 6
      %s40 = sphi 0, %s42
      %s43 = sphi 0, %s40
      %s44 = sphi 0, %s43
      %s60 = sphi 0, %s44
      %s66 = sphi 0, %s68
      %s69 = sphi 0, %s66
      %s70 = sphi 0, %s69
      %s86 = sphi 0, %s70
      %s92 = sphi 0, %s94
      %s95 = sphi 0, %s92
      %s96 = sphi 0, %s95
      %s112 = sphi 0, %s96
      %s118 = sphi 0, %s120
      %s121 = sphi 0, %s118
      %s122 = sphi 0, %s121
      %s138 = sphi 0, %s122
      %s144 = sphi 0, %s146
      %s147 = sphi 0, %s144
      %s148 = sphi 0, %s147
      %s164 = sphi 0, %s148
      %s170 = sphi 0, %s172
      %s173 = sphi 0, %s170
      %s174 = sphi 0, %s173
      %s190 = sphi 0, %s174
      %s196 = sphi 0, %s198
      %s199 = sphi 0, %s196
      %s200 = sphi 0, %s199
      %s216 = sphi 0, %s200
      %s222 = sphi 0, %s224
      %s225 = sphi 0, %s222
      %s226 = sphi 0, %s225
      %s242 = sphi 0, %s226
      %s246 = sphi 0, %s246
      %s248 = sphi 0, %s246
      %s249 = sphi 0, %s248
      %s263 = sphi 0, %s249
      %s267 = sphi 0, %s267
      %s269 = sphi 0, %s267
      %s270 = sphi 0, %s269
      %s284 = sphi 0, %s270
      %s288 = sphi 0, %s288
      %s290 = sphi 0, %s288
      %s291 = sphi 0, %s290
      %s305 = sphi 0, %s291
      %s311 = sphi 0, %s313
      %s314 = sphi 0, %s311
      %s315 = sphi 0, %s314
      %s331 = sphi 0, %s315
    $region4: #{tpu_custom_call.1} parent=1 // loop_header_branch
      %33 = sbr.rel (%p31) target = $region8
    $region5: #{tpu_custom_call.1} parent=1 // loop_body
      %s35 = ssub.s32 %s30, 1
      %s36 = ssub.s32 %s30, 2
      %s37 = sadd.s32 %s30, 1
      %s38 = ssub.s32 %s30, %s37
      %p39 = scmp.eq.s32.totalorder %s38, 0
      %s41 = sadd.s32 %s40, 1
      %s42 = scalar_select %p39, %s40, %s41
      %p45 = pneg %p39
      %p46 = scmp.eq.s32.totalorder %s30, 3
      %p47 = por %p45, %p46
      %p48 = scmp.ne.s32.totalorder %s40, %s43
      %p49 = scmp.eq.s32.totalorder %s30, 0
      %p50 = por %p48, %p49
      %p51 = scmp.ne.s32.totalorder %s40, %s43
      %p52 = scmp.eq.s32.totalorder %s35, 3
      %p53 = por %p51, %p52
      %p54 = scmp.ne.s32.totalorder %s43, %s44
      %p55 = scmp.eq.s32.totalorder %s35, 0
      %p56 = por %p54, %p55
      %p57 = scmp.ne.s32.totalorder %s43, %s44
      %p58 = scmp.eq.s32.totalorder %s36, 3
      %p59 = por %p57, %p58
      %p61 = scmp.ne.s32.totalorder %s44, %s60
      %p62 = scmp.eq.s32.totalorder %s36, 0
      %p63 = por %p61, %p62
      %s64 = ssub.s32 %s30, %s37
      %p65 = scmp.eq.s32.totalorder %s64, 0
      %s67 = sadd.s32 %s66, 1
      %s68 = scalar_select %p65, %s66, %s67
      %p71 = pneg %p65
      %p72 = scmp.eq.s32.totalorder %s30, 3
      %p73 = por %p71, %p72
      %p74 = scmp.ne.s32.totalorder %s66, %s69
      %p75 = scmp.eq.s32.totalorder %s30, 0
      %p76 = por %p74, %p75
      %p77 = scmp.ne.s32.totalorder %s66, %s69
      %p78 = scmp.eq.s32.totalorder %s35, 3
      %p79 = por %p77, %p78
      %p80 = scmp.ne.s32.totalorder %s69, %s70
      %p81 = scmp.eq.s32.totalorder %s35, 0
      %p82 = por %p80, %p81
      %p83 = scmp.ne.s32.totalorder %s69, %s70
      %p84 = scmp.eq.s32.totalorder %s36, 3
      %p85 = por %p83, %p84
      %p87 = scmp.ne.s32.totalorder %s70, %s86
      %p88 = scmp.eq.s32.totalorder %s36, 0
      %p89 = por %p87, %p88
      %s90 = ssub.s32 %s30, %s37
      %p91 = scmp.eq.s32.totalorder %s90, 0
      %s93 = sadd.s32 %s92, 1
      %s94 = scalar_select %p91, %s92, %s93
      %p97 = pneg %p91
      %p98 = scmp.eq.s32.totalorder %s30, 3
      %p99 = por %p97, %p98
      %p100 = scmp.ne.s32.totalorder %s92, %s95
      %p101 = scmp.eq.s32.totalorder %s30, 0
      %p102 = por %p100, %p101
      %p103 = scmp.ne.s32.totalorder %s92, %s95
      %p104 = scmp.eq.s32.totalorder %s35, 3
      %p105 = por %p103, %p104
      %p106 = scmp.ne.s32.totalorder %s95, %s96
      %p107 = scmp.eq.s32.totalorder %s35, 0
      %p108 = por %p106, %p107
      %p109 = scmp.ne.s32.totalorder %s95, %s96
      %p110 = scmp.eq.s32.totalorder %s36, 3
      %p111 = por %p109, %p110
      %p113 = scmp.ne.s32.totalorder %s96, %s112
      %p114 = scmp.eq.s32.totalorder %s36, 0
      %p115 = por %p113, %p114
      %s116 = ssub.s32 %s30, %s37
      %p117 = scmp.eq.s32.totalorder %s116, 0
      %s119 = sadd.s32 %s118, 1
      %s120 = scalar_select %p117, %s118, %s119
      %p123 = pneg %p117
      %p124 = scmp.eq.s32.totalorder %s30, 3
      %p125 = por %p123, %p124
      %p126 = scmp.ne.s32.totalorder %s118, %s121
      %p127 = scmp.eq.s32.totalorder %s30, 0
      %p128 = por %p126, %p127
      %p129 = scmp.ne.s32.totalorder %s118, %s121
      %p130 = scmp.eq.s32.totalorder %s35, 3
      %p131 = por %p129, %p130
      %p132 = scmp.ne.s32.totalorder %s121, %s122
      %p133 = scmp.eq.s32.totalorder %s35, 0
      %p134 = por %p132, %p133
      %p135 = scmp.ne.s32.totalorder %s121, %s122
      %p136 = scmp.eq.s32.totalorder %s36, 3
      %p137 = por %p135, %p136
      %p139 = scmp.ne.s32.totalorder %s122, %s138
      %p140 = scmp.eq.s32.totalorder %s36, 0
      %p141 = por %p139, %p140
      %s142 = ssub.s32 %s30, %s37
      %p143 = scmp.eq.s32.totalorder %s142, 0
      %s145 = sadd.s32 %s144, 1
      %s146 = scalar_select %p143, %s144, %s145
      %p149 = pneg %p143
      %p150 = scmp.eq.s32.totalorder %s30, 3
      %p151 = por %p149, %p150
      %p152 = scmp.ne.s32.totalorder %s144, %s147
      %p153 = scmp.eq.s32.totalorder %s30, 0
      %p154 = por %p152, %p153
      %p155 = scmp.ne.s32.totalorder %s144, %s147
      %p156 = scmp.eq.s32.totalorder %s35, 3
      %p157 = por %p155, %p156
      %p158 = scmp.ne.s32.totalorder %s147, %s148
      %p159 = scmp.eq.s32.totalorder %s35, 0
      %p160 = por %p158, %p159
      %p161 = scmp.ne.s32.totalorder %s147, %s148
      %p162 = scmp.eq.s32.totalorder %s36, 3
      %p163 = por %p161, %p162
      %p165 = scmp.ne.s32.totalorder %s148, %s164
      %p166 = scmp.eq.s32.totalorder %s36, 0
      %p167 = por %p165, %p166
      %s168 = ssub.s32 %s30, %s37
      %p169 = scmp.eq.s32.totalorder %s168, 0
      %s171 = sadd.s32 %s170, 1
      %s172 = scalar_select %p169, %s170, %s171
      %p175 = pneg %p169
      %p176 = scmp.eq.s32.totalorder %s30, 3
      %p177 = por %p175, %p176
      %p178 = scmp.ne.s32.totalorder %s170, %s173
      %p179 = scmp.eq.s32.totalorder %s30, 0
      %p180 = por %p178, %p179
      %p181 = scmp.ne.s32.totalorder %s170, %s173
      %p182 = scmp.eq.s32.totalorder %s35, 3
      %p183 = por %p181, %p182
      %p184 = scmp.ne.s32.totalorder %s173, %s174
      %p185 = scmp.eq.s32.totalorder %s35, 0
      %p186 = por %p184, %p185
      %p187 = scmp.ne.s32.totalorder %s173, %s174
      %p188 = scmp.eq.s32.totalorder %s36, 3
      %p189 = por %p187, %p188
      %p191 = scmp.ne.s32.totalorder %s174, %s190
      %p192 = scmp.eq.s32.totalorder %s36, 0
      %p193 = por %p191, %p192
      %s194 = ssub.s32 %s30, %s37
      %p195 = scmp.eq.s32.totalorder %s194, 0
      %s197 = sadd.s32 %s196, 1
      %s198 = scalar_select %p195, %s196, %s197
      %p201 = pneg %p195
      %p202 = scmp.eq.s32.totalorder %s30, 3
      %p203 = por %p201, %p202
      %p204 = scmp.ne.s32.totalorder %s196, %s199
      %p205 = scmp.eq.s32.totalorder %s30, 0
      %p206 = por %p204, %p205
      %p207 = scmp.ne.s32.totalorder %s196, %s199
      %p208 = scmp.eq.s32.totalorder %s35, 3
      %p209 = por %p207, %p208
      %p210 = scmp.ne.s32.totalorder %s199, %s200
      %p211 = scmp.eq.s32.totalorder %s35, 0
      %p212 = por %p210, %p211
      %p213 = scmp.ne.s32.totalorder %s199, %s200
      %p214 = scmp.eq.s32.totalorder %s36, 3
      %p215 = por %p213, %p214
      %p217 = scmp.ne.s32.totalorder %s200, %s216
      %p218 = scmp.eq.s32.totalorder %s36, 0
      %p219 = por %p217, %p218
      %s220 = ssub.s32 %s30, %s37
      %p221 = scmp.eq.s32.totalorder %s220, 0
      %s223 = sadd.s32 %s222, 1
      %s224 = scalar_select %p221, %s222, %s223
      %p227 = pneg %p221
      %p228 = scmp.eq.s32.totalorder %s30, 3
      %p229 = por %p227, %p228
      %p230 = scmp.ne.s32.totalorder %s222, %s225
      %p231 = scmp.eq.s32.totalorder %s30, 0
      %p232 = por %p230, %p231
      %p233 = scmp.ne.s32.totalorder %s222, %s225
      %p234 = scmp.eq.s32.totalorder %s35, 3
      %p235 = por %p233, %p234
      %p236 = scmp.ne.s32.totalorder %s225, %s226
      %p237 = scmp.eq.s32.totalorder %s35, 0
      %p238 = por %p236, %p237
      %p239 = scmp.ne.s32.totalorder %s225, %s226
      %p240 = scmp.eq.s32.totalorder %s36, 3
      %p241 = por %p239, %p240
      %p243 = scmp.ne.s32.totalorder %s226, %s242
      %p244 = scmp.eq.s32.totalorder %s36, 0
      %p245 = por %p243, %p244
      %s247 = sadd.s32 %s246, 1
      %p250 = scmp.eq.s32.totalorder %s30, 3
      %p251 = scmp.ne.s32.totalorder %s246, %s248
      %p252 = scmp.eq.s32.totalorder %s30, 0
      %p253 = por %p251, %p252
      %p254 = scmp.ne.s32.totalorder %s246, %s248
      %p255 = scmp.eq.s32.totalorder %s35, 3
      %p256 = por %p254, %p255
      %p257 = scmp.ne.s32.totalorder %s248, %s249
      %p258 = scmp.eq.s32.totalorder %s35, 0
      %p259 = por %p257, %p258
      %p260 = scmp.ne.s32.totalorder %s248, %s249
      %p261 = scmp.eq.s32.totalorder %s36, 3
      %p262 = por %p260, %p261
      %p264 = scmp.ne.s32.totalorder %s249, %s263
      %p265 = scmp.eq.s32.totalorder %s36, 0
      %p266 = por %p264, %p265
      %s268 = sadd.s32 %s267, 1
      %p271 = scmp.eq.s32.totalorder %s30, 3
      %p272 = scmp.ne.s32.totalorder %s267, %s269
      %p273 = scmp.eq.s32.totalorder %s30, 0
      %p274 = por %p272, %p273
      %p275 = scmp.ne.s32.totalorder %s267, %s269
      %p276 = scmp.eq.s32.totalorder %s35, 3
      %p277 = por %p275, %p276
      %p278 = scmp.ne.s32.totalorder %s269, %s270
      %p279 = scmp.eq.s32.totalorder %s35, 0
      %p280 = por %p278, %p279
      %p281 = scmp.ne.s32.totalorder %s269, %s270
      %p282 = scmp.eq.s32.totalorder %s36, 3
      %p283 = por %p281, %p282
      %p285 = scmp.ne.s32.totalorder %s270, %s284
      %p286 = scmp.eq.s32.totalorder %s36, 0
      %p287 = por %p285, %p286
      %s289 = sadd.s32 %s288, 1
      %p292 = scmp.eq.s32.totalorder %s30, 3
      %p293 = scmp.ne.s32.totalorder %s288, %s290
      %p294 = scmp.eq.s32.totalorder %s30, 0
      %p295 = por %p293, %p294
      %p296 = scmp.ne.s32.totalorder %s288, %s290
      %p297 = scmp.eq.s32.totalorder %s35, 3
      %p298 = por %p296, %p297
      %p299 = scmp.ne.s32.totalorder %s290, %s291
      %p300 = scmp.eq.s32.totalorder %s35, 0
      %p301 = por %p299, %p300
      %p302 = scmp.ne.s32.totalorder %s290, %s291
      %p303 = scmp.eq.s32.totalorder %s36, 3
      %p304 = por %p302, %p303
      %p306 = scmp.ne.s32.totalorder %s291, %s305
      %p307 = scmp.eq.s32.totalorder %s36, 0
      %p308 = por %p306, %p307
      %s309 = ssub.s32 %s30, %s37
      %p310 = scmp.eq.s32.totalorder %s309, 0
      %s312 = sadd.s32 %s311, 1
      %s313 = scalar_select %p310, %s311, %s312
      %p316 = pneg %p310
      %p317 = scmp.eq.s32.totalorder %s30, 3
      %p318 = por %p316, %p317
      %p319 = scmp.ne.s32.totalorder %s311, %s314
      %p320 = scmp.eq.s32.totalorder %s30, 0
      %p321 = por %p319, %p320
      %p322 = scmp.ne.s32.totalorder %s311, %s314
      %p323 = scmp.eq.s32.totalorder %s35, 3
      %p324 = por %p322, %p323
      %p325 = scmp.ne.s32.totalorder %s314, %s315
      %p326 = scmp.eq.s32.totalorder %s35, 0
      %p327 = por %p325, %p326
      %p328 = scmp.ne.s32.totalorder %s314, %s315
      %p329 = scmp.eq.s32.totalorder %s36, 3
      %p330 = por %p328, %p329
      %p332 = scmp.ne.s32.totalorder %s315, %s331
      %p333 = scmp.eq.s32.totalorder %s36, 0
      %p334 = por %p332, %p333
      %p335 = scmp.le.s32.totalorder 1, %s30
      %p336 = scmp.lt.s32.totalorder %s30, 5
      %p337 = pnand %p335, %p336
      %p338 = pneg %p337
      // Predicated region
      $region9: #{tpu_custom_call.1} parent=5 // pred_check
        _
      $region10: #{tpu_custom_call.1} parent=5 // pred_check_branch
        %340 = sbr.rel (%p337) target = $region12
      $region11: #{tpu_custom_call.1} parent=5 // pred_region
        %s341 = ssub.s32 %s30, 1
        // Predicated region
        $region13: #{tpu_custom_call.1} parent=11 // pred_check
          %p342 = pneg %p259
        $region14: #{tpu_custom_call.1} parent=11 // pred_check_branch
          %344 = sbr.rel (%p342) target = $region16
        $region15: #{tpu_custom_call.1} parent=11 // pred_region
          _
        $region16: #{tpu_custom_call.1} parent=11 // pred_fallthru
          _
        // Predicated region
        $region17: #{tpu_custom_call.1} parent=11 // pred_check
          %p345 = pneg %p280
        $region18: #{tpu_custom_call.1} parent=11 // pred_check_branch
          %347 = sbr.rel (%p345) target = $region20
        $region19: #{tpu_custom_call.1} parent=11 // pred_region
          %s349 = ssub.s32 2048, 2048
          %350 = vsyncadd [#allocation9], %s349
          %s351 = sshll.u32 [#allocation10], 4
          %s352 = int_to_ptr.vmem [resolvable:$true] %s351
          %357 = dma.hbm_to_vmem [thread:$0]  %s9, 2048, %s352, [#allocation9], 128, 128, 8
        $region20: #{tpu_custom_call.1} parent=11 // pred_fallthru
          _
        // Predicated region
        $region21: #{tpu_custom_call.1} parent=11 // pred_check
          %p358 = pneg %p301
        $region22: #{tpu_custom_call.1} parent=11 // pred_check_branch
          %360 = sbr.rel (%p358) target = $region24
        $region23: #{tpu_custom_call.1} parent=11 // pred_region
          %s362 = ssub.s32 2048, 2048
          %363 = vsyncadd [#allocation12], %s362
          %s364 = sshll.u32 [#allocation11], 4
          %s365 = int_to_ptr.vmem [resolvable:$true] %s364
          %370 = dma.hbm_to_vmem [thread:$0]  %s10, 2048, %s365, [#allocation12], 128, 128, 8
        $region24: #{tpu_custom_call.1} parent=11 // pred_fallthru
          _
      $region12: #{tpu_custom_call.1} parent=5 // pred_fallthru
        _
      %p371 = scmp.lt.s32.totalorder %s30, 4
      // Predicated region
      $region25: #{tpu_custom_call.1} parent=5 // pred_check
        %p372 = pneg %p371
      $region26: #{tpu_custom_call.1} parent=5 // pred_check_branch
        %374 = sbr.rel (%p372) target = $region28
      $region27: #{tpu_custom_call.1} parent=5 // pred_region
        // Predicated region
        $region29: #{tpu_custom_call.1} parent=27 // pred_check
          %p375 = pneg %p50
        $region30: #{tpu_custom_call.1} parent=27 // pred_check_branch
          %377 = sbr.rel (%p375) target = $region32
        $region31: #{tpu_custom_call.1} parent=27 // pred_region
          %s378 = sand.u32 %s40, 1
          %s379 = scalar_lea.sflag [#allocation3], %s378
          %s380 = sand.u32 %s40, 1
          %s381 = smul.addr %s380, 16
          %s382 = scalar_lea.vmem [#allocation2], %s381
          %s384 = ssub.s32 256, 256
          %385 = vsyncadd %s379, %s384
          %s386 = smul.addr %s30, 2
          %s387 = smul.addr %s386, 128
          %s388 = scalar_lea.hbm %s0, %s387
          %s389 = sshll.u32 %s382, 4
          %s390 = int_to_ptr.vmem [resolvable:$true] %s389
          %395 = dma.hbm_to_vmem [thread:$0]  %s388, 256, %s390, %s379, 128, 128, 8
        $region32: #{tpu_custom_call.1} parent=27 // pred_fallthru
          _
        // Predicated region
        $region33: #{tpu_custom_call.1} parent=27 // pred_check
          %p396 = pneg %p76
        $region34: #{tpu_custom_call.1} parent=27 // pred_check_branch
          %398 = sbr.rel (%p396) target = $region36
        $region35: #{tpu_custom_call.1} parent=27 // pred_region
          %s399 = sand.u32 %s30, 1
          %s400 = scalar_lea.sflag [#allocation6], %s399
          %s401 = sand.u32 %s66, 1
          %s402 = smul.addr %s401, 16
          %s403 = scalar_lea.vmem [#allocation5], %s402
          %s405 = ssub.s32 256, 256
          %406 = vsyncadd %s400, %s405
          %s407 = smul.addr %s30, 2
          %s408 = smul.addr %s407, 128
          %s409 = scalar_lea.hbm %s1, %s408
          %s410 = sshll.u32 %s403, 4
          %s411 = int_to_ptr.vmem [resolvable:$true] %s410
          %416 = dma.hbm_to_vmem [thread:$0]  %s409, 256, %s411, %s400, 128, 128, 8
        $region36: #{tpu_custom_call.1} parent=27 // pred_fallthru
          _
        // Predicated region
        $region37: #{tpu_custom_call.1} parent=27 // pred_check
          %p417 = pneg %p102
        $region38: #{tpu_custom_call.1} parent=27 // pred_check_branch
          %419 = sbr.rel (%p417) target = $region40
        $region39: #{tpu_custom_call.1} parent=27 // pred_region
          %s420 = sand.u32 %s30, 1
          %s421 = scalar_lea.sflag [#allocation6], %s420
          %s422 = sand.u32 %s92, 1
          %s423 = smul.addr %s422, 16
          %s424 = scalar_lea.vmem [#allocation7], %s423
          %s426 = ssub.s32 256, 256
          %427 = vsyncadd %s421, %s426
          %s428 = smul.addr %s30, 2
          %s429 = smul.addr %s428, 128
          %s430 = scalar_lea.hbm %s2, %s429
          %s431 = sshll.u32 %s424, 4
          %s432 = int_to_ptr.vmem [resolvable:$true] %s431
          %437 = dma.hbm_to_vmem [thread:$0]  %s430, 256, %s432, %s421, 128, 128, 8
        $region40: #{tpu_custom_call.1} parent=27 // pred_fallthru
          _
        // Predicated region
        $region41: #{tpu_custom_call.1} parent=27 // pred_check
          %p438 = pneg %p128
        $region42: #{tpu_custom_call.1} parent=27 // pred_check_branch
          %440 = sbr.rel (%p438) target = $region44
        $region43: #{tpu_custom_call.1} parent=27 // pred_region
          %s441 = sand.u32 %s30, 1
          %s442 = scalar_lea.sflag [#allocation9], %s441
          %s443 = sand.u32 %s118, 1
          %s444 = smul.addr %s443, 16
          %s445 = scalar_lea.vmem [#allocation8], %s444
          %s447 = ssub.s32 256, 256
          %448 = vsyncadd %s442, %s447
          %s449 = smul.addr %s30, 2
          %s450 = smul.addr %s449, 128
          %s451 = scalar_lea.hbm %s3, %s450
          %s452 = sshll.u32 %s445, 4
          %s453 = int_to_ptr.vmem [resolvable:$true] %s452
          %458 = dma.hbm_to_vmem [thread:$0]  %s451, 256, %s453, %s442, 128, 128, 8
        $region44: #{tpu_custom_call.1} parent=27 // pred_fallthru
          _
        // Predicated region
        $region45: #{tpu_custom_call.1} parent=27 // pred_check
          %p459 = pneg %p154
        $region46: #{tpu_custom_call.1} parent=27 // pred_check_branch
          %461 = sbr.rel (%p459) target = $region48
        $region47: #{tpu_custom_call.1} parent=27 // pred_region
          %p462 = scmp.lt.s32.totalorder %s30, 3
          %s463 = scalar_select %p462, %s30, 3
          %s464 = smul.addr %s463, 4
          %s465 = smul.addr %s464, 8
          %s466 = scalar_lea.vmem %s4, %s465
        $region48: #{tpu_custom_call.1} parent=27 // pred_fallthru
          _
        // Predicated region
        $region49: #{tpu_custom_call.1} parent=27 // pred_check
          %p467 = pneg %p180
        $region50: #{tpu_custom_call.1} parent=27 // pred_check_branch
          %469 = sbr.rel (%p467) target = $region52
        $region51: #{tpu_custom_call.1} parent=27 // pred_region
          %p470 = scmp.lt.s32.totalorder %s30, 3
          %s471 = scalar_select %p470, %s30, 3
          %s472 = smul.addr %s471, 2
          %s473 = smul.addr %s472, 8
          %s474 = scalar_lea.vmem %s5, %s473
        $region52: #{tpu_custom_call.1} parent=27 // pred_fallthru
          _
        // Predicated region
        $region53: #{tpu_custom_call.1} parent=27 // pred_check
          %p475 = pneg %p206
        $region54: #{tpu_custom_call.1} parent=27 // pred_check_branch
          %477 = sbr.rel (%p475) target = $region56
        $region55: #{tpu_custom_call.1} parent=27 // pred_region
          %p478 = scmp.lt.s32.totalorder %s30, 3
          %s479 = scalar_select %p478, %s30, 3
          %s480 = smul.addr %s479, 2
          %s481 = smul.addr %s480, 8
          %s482 = scalar_lea.vmem %s6, %s481
        $region56: #{tpu_custom_call.1} parent=27 // pred_fallthru
          _
        // Predicated region
        $region57: #{tpu_custom_call.1} parent=27 // pred_check
          %p483 = pneg %p232
        $region58: #{tpu_custom_call.1} parent=27 // pred_check_branch
          %485 = sbr.rel (%p483) target = $region60
        $region59: #{tpu_custom_call.1} parent=27 // pred_region
          %p486 = scmp.lt.s32.totalorder %s30, 3
          %s487 = scalar_select %p486, %s30, 3
          %s488 = smul.addr %s487, 4
          %s489 = smul.addr %s488, 8
          %s490 = scalar_lea.vmem %s7, %s489
        $region60: #{tpu_custom_call.1} parent=27 // pred_fallthru
          _
      $region28: #{tpu_custom_call.1} parent=5 // pred_fallthru
        _
      %p491 = scmp.le.s32.totalorder 1, %s30
      %p492 = scmp.lt.s32.totalorder %s30, 5
      %p493 = pnand %p491, %p492
      %p494 = pneg %p493
      // Predicated region
      $region61: #{tpu_custom_call.1} parent=5 // pred_check
        _
      $region62: #{tpu_custom_call.1} parent=5 // pred_check_branch
        %496 = sbr.rel (%p493) target = $region64
      $region63: #{tpu_custom_call.1} parent=5 // pred_region
        %s497 = ssub.s32 %s30, 1
        %s498 = sand.u32 %s43, 1
        %s499 = scalar_lea.sflag [#allocation3], %s498
        %s500 = sand.u32 %s43, 1
        %s501 = smul.addr %s500, 16
        %s502 = scalar_lea.vmem [#allocation2], %s501
        // Predicated region
        $region65: #{tpu_custom_call.1} parent=63 // pred_check
          %p503 = pneg %p56
        $region66: #{tpu_custom_call.1} parent=63 // pred_check_branch
          %505 = sbr.rel (%p503) target = $region68
        $region67: #{tpu_custom_call.1} parent=63 // pred_region
          %506 = dma.done %s499, 256
        $region68: #{tpu_custom_call.1} parent=63 // pred_fallthru
          _
        %s507 = sand.u32 %s35, 1
        %s508 = scalar_lea.sflag [#allocation6], %s507
        %s509 = sand.u32 %s69, 1
        %s510 = smul.addr %s509, 16
        %s511 = scalar_lea.vmem [#allocation5], %s510
        // Predicated region
        $region69: #{tpu_custom_call.1} parent=63 // pred_check
          %p512 = pneg %p82
        $region70: #{tpu_custom_call.1} parent=63 // pred_check_branch
          %514 = sbr.rel (%p512) target = $region72
        $region71: #{tpu_custom_call.1} parent=63 // pred_region
          %515 = dma.done %s508, 256
        $region72: #{tpu_custom_call.1} parent=63 // pred_fallthru
          _
        %s516 = sand.u32 %s35, 1
        %s517 = scalar_lea.sflag [#allocation6], %s516
        %s518 = sand.u32 %s95, 1
        %s519 = smul.addr %s518, 16
        %s520 = scalar_lea.vmem [#allocation7], %s519
        // Predicated region
        $region73: #{tpu_custom_call.1} parent=63 // pred_check
          %p521 = pneg %p108
        $region74: #{tpu_custom_call.1} parent=63 // pred_check_branch
          %523 = sbr.rel (%p521) target = $region76
        $region75: #{tpu_custom_call.1} parent=63 // pred_region
          %524 = dma.done %s517, 256
        $region76: #{tpu_custom_call.1} parent=63 // pred_fallthru
          _
        %s525 = sand.u32 %s35, 1
        %s526 = scalar_lea.sflag [#allocation9], %s525
        %s527 = sand.u32 %s121, 1
        %s528 = smul.addr %s527, 16
        %s529 = scalar_lea.vmem [#allocation8], %s528
        // Predicated region
        $region77: #{tpu_custom_call.1} parent=63 // pred_check
          %p530 = pneg %p134
        $region78: #{tpu_custom_call.1} parent=63 // pred_check_branch
          %532 = sbr.rel (%p530) target = $region80
        $region79: #{tpu_custom_call.1} parent=63 // pred_region
          %533 = dma.done %s526, 256
        $region80: #{tpu_custom_call.1} parent=63 // pred_fallthru
          _
        // Predicated region
        $region81: #{tpu_custom_call.1} parent=63 // pred_check
          %p534 = pneg %p280
        $region82: #{tpu_custom_call.1} parent=63 // pred_check_branch
          %536 = sbr.rel (%p534) target = $region84
        $region83: #{tpu_custom_call.1} parent=63 // pred_region
          %537 = dma.done [#allocation9], 2048
        $region84: #{tpu_custom_call.1} parent=63 // pred_fallthru
          _
        // Predicated region
        $region85: #{tpu_custom_call.1} parent=63 // pred_check
          %p538 = pneg %p301
        $region86: #{tpu_custom_call.1} parent=63 // pred_check_branch
          %540 = sbr.rel (%p538) target = $region88
        $region87: #{tpu_custom_call.1} parent=63 // pred_region
          %541 = dma.done [#allocation12], 2048
        $region88: #{tpu_custom_call.1} parent=63 // pred_fallthru
          _
        %s542 = sand.u32 %s43, 1
        %s543 = scalar_lea.sflag [#allocation3], %s542
        %s544 = sand.u32 %s43, 1
        %s545 = smul.addr %s544, 16
        %s546 = scalar_lea.vmem [#allocation2], %s545
        %p547 = pneg %p56
        %p548 = pneg %p53
        %s549 = sand.u32 %s35, 1
        %s550 = scalar_lea.sflag [#allocation6], %s549
        %s551 = sand.u32 %s69, 1
        %s552 = smul.addr %s551, 16
        %s553 = scalar_lea.vmem [#allocation5], %s552
        %p554 = pneg %p82
        %p555 = pneg %p79
        %s556 = sand.u32 %s35, 1
        %s557 = scalar_lea.sflag [#allocation6], %s556
        %s558 = sand.u32 %s95, 1
        %s559 = smul.addr %s558, 16
        %s560 = scalar_lea.vmem [#allocation7], %s559
        %p561 = pneg %p108
        %p562 = pneg %p105
        %s563 = sand.u32 %s35, 1
        %s564 = scalar_lea.sflag [#allocation9], %s563
        %s565 = sand.u32 %s121, 1
        %s566 = smul.addr %s565, 16
        %s567 = scalar_lea.vmem [#allocation8], %s566
        %p568 = pneg %p134
        %p569 = pneg %p131
        %p570 = scmp.lt.s32.totalorder %s35, 3
        %s571 = scalar_select %p570, %s35, 3
        %s572 = smul.addr %s571, 4
        %s573 = smul.addr %s572, 8
        %s574 = scalar_lea.vmem %s4, %s573
        %p575 = pneg %p160
        %p576 = pneg %p157
        %p577 = scmp.lt.s32.totalorder %s35, 3
        %s578 = scalar_select %p577, %s35, 3
        %s579 = smul.addr %s578, 2
        %s580 = smul.addr %s579, 8
        %s581 = scalar_lea.vmem %s5, %s580
        %p582 = pneg %p186
        %p583 = pneg %p183
        %p584 = scmp.lt.s32.totalorder %s35, 3
        %s585 = scalar_select %p584, %s35, 3
        %s586 = smul.addr %s585, 2
        %s587 = smul.addr %s586, 8
        %s588 = scalar_lea.vmem %s6, %s587
        %p589 = pneg %p212
        %p590 = pneg %p209
        %p591 = scmp.lt.s32.totalorder %s35, 3
        %s592 = scalar_select %p591, %s35, 3
        %s593 = smul.addr %s592, 4
        %s594 = smul.addr %s593, 8
        %s595 = scalar_lea.vmem %s7, %s594
        %p596 = pneg %p238
        %p597 = pneg %p235
        %p598 = pneg %p259
        %p599 = pneg %p256
        %p600 = pneg %p280
        %p601 = pneg %p277
        %p602 = pneg %p301
        %p603 = pneg %p298
        %p604 = pneg %p327
        %p605 = pneg %p324
        %s606 = sand.u32 %s314, 1
        %s607 = scalar_lea.sflag [#allocation4], %s606
        %s608 = sand.u32 %s314, 1
        %s609 = smul.addr %s608, 32
        %s610 = scalar_lea.vmem [#allocation13], %s609
        %p611 = scmp.lt.s32.totalorder %s35, 3
        %s612 = scalar_select %p611, %s35, 3
        %s613 = smul.addr %s612, 4
        %s614 = smul.addr %s613, 8
        %s615 = scalar_lea.vmem %s4, %s614
        %p616 = scmp.lt.s32.totalorder %s35, 3
        %s617 = scalar_select %p616, %s35, 3
        %s618 = smul.addr %s617, 2
        %s619 = smul.addr %s618, 8
        %s620 = scalar_lea.vmem %s5, %s619
        %p621 = scmp.lt.s32.totalorder %s35, 3
        %s622 = scalar_select %p621, %s35, 3
        %s623 = smul.addr %s622, 2
        %s624 = smul.addr %s623, 8
        %s625 = scalar_lea.vmem %s6, %s624
        %p626 = scmp.lt.s32.totalorder %s35, 3
        %s627 = scalar_select %p626, %s35, 3
        %s628 = smul.addr %s627, 4
        %s629 = smul.addr %s628, 8
        %s630 = scalar_lea.vmem %s7, %s629
        %v631 = vld [vmem:[%s502] sm:$0xff]
        %v632 = vld [vmem:[%s502 + $0x8] sm:$0xff]
        %v633 = vld [vmem:[%s511] sm:$0xff]
        %v634 = vld [vmem:[%s511 + $0x8] sm:$0xff]
        %v635 = vld [vmem:[%s520] sm:$0xff]
        %v636 = vld [vmem:[%s520 + $0x8] sm:$0xff]
        %v637 = vld [vmem:[%s620] sm:$0xff]
        %v638 = vld [vmem:[%s620 + $0x8] sm:$0xff]
        %v639 = vld [vmem:[%s8] sm:$0xff]
        %v640 = vld [vmem:[%s8 + $0x8] sm:$0xff]
        %v641 = vld [vmem:[%s8 + $0x10] sm:$0xff]
        %v642 = vld [vmem:[%s8 + $0x18] sm:$0xff]
        %v643 = vld [vmem:[%s8 + $0x20] sm:$0xff]
        %v644 = vld [vmem:[%s8 + $0x28] sm:$0xff]
        %v645 = vld [vmem:[%s8 + $0x30] sm:$0xff]
        %v646 = vld [vmem:[%s8 + $0x38] sm:$0xff]
        %v647 = vld [vmem:[%s8 + $0x40] sm:$0xff]
        %v648 = vld [vmem:[%s8 + $0x48] sm:$0xff]
        %v649 = vld [vmem:[%s8 + $0x50] sm:$0xff]
        %v650 = vld [vmem:[%s8 + $0x58] sm:$0xff]
        %v651 = vld [vmem:[%s8 + $0x60] sm:$0xff]
        %v652 = vld [vmem:[%s8 + $0x68] sm:$0xff]
        %v653 = vld [vmem:[%s8 + $0x70] sm:$0xff]
        %v654 = vld [vmem:[%s8 + $0x78] sm:$0xff]
        %655 = vmatprep.subr.mxu0 0.0
        %656 = vmatpush1.msra.mxu0 %v639
        %657 = vmatprep.subr.mxu0 0.0
        %658 = vmatpush1.msra.mxu0 %v640
        %659 = vmatprep.subr.mxu0 0.0
        %660 = vmatpush1.msra.mxu0 %v641
        %661 = vmatprep.subr.mxu0 0.0
        %662 = vmatpush1.msra.mxu0 %v642
        %663 = vmatprep.subr.mxu0 0.0
        %664 = vmatpush1.msra.mxu0 %v643
        %665 = vmatprep.subr.mxu0 0.0
        %666 = vmatpush1.msra.mxu0 %v644
        %667 = vmatprep.subr.mxu0 0.0
        %668 = vmatpush1.msra.mxu0 %v645
        %669 = vmatprep.subr.mxu0 0.0
        %670 = vmatpush1.msra.mxu0 %v646
        %671 = vmatprep.subr.mxu0 0.0
        %672 = vmatpush1.msra.mxu0 %v647
        %673 = vmatprep.subr.mxu0 0.0
        %674 = vmatpush1.msra.mxu0 %v648
        %675 = vmatprep.subr.mxu0 0.0
        %676 = vmatpush1.msra.mxu0 %v649
        %677 = vmatprep.subr.mxu0 0.0
        %678 = vmatpush1.msra.mxu0 %v650
        %679 = vmatprep.subr.mxu0 0.0
        %680 = vmatpush1.msra.mxu0 %v651
        %681 = vmatprep.subr.mxu0 0.0
        %682 = vmatpush1.msra.mxu0 %v652
        %683 = vmatprep.subr.mxu0 0.0
        %684 = vmatpush1.msra.mxu0 %v653
        %685 = vmatprep.subr.mxu0 0.0
        %686 = vmatpush1.msra.mxu0 %v654
        %687 = vmatprep.subr.mxu0 0.0
        %688 = vmatpush1.msra.mxu0 0.0
        %689 = vmatprep.subr.mxu0 0.0
        %690 = vmatpush1.msra.mxu0 0.0
        %691 = vmatprep.subr.mxu0 0.0
        %692 = vmatpush1.msra.mxu0 0.0
        %693 = vmatprep.subr.mxu0 0.0
        %694 = vmatpush1.msra.mxu0 0.0
        %695 = vmatprep.subr.mxu0 0.0
        %696 = vmatpush1.msra.mxu0 0.0
        %697 = vmatprep.subr.mxu0 0.0
        %698 = vmatpush1.msra.mxu0 0.0
        %699 = vmatprep.subr.mxu0 0.0
        %700 = vmatpush1.msra.mxu0 0.0
        %701 = vmatprep.subr.mxu0 0.0
        %702 = vmatpush1.msra.mxu0 0.0
        %703 = vmatprep.subr.mxu0 0.0
        %704 = vmatpush1.msra.mxu0 0.0
        %705 = vmatprep.subr.mxu0 0.0
        %706 = vmatpush1.msra.mxu0 0.0
        %707 = vmatprep.subr.mxu0 0.0
        %708 = vmatpush1.msra.mxu0 0.0
        %709 = vmatprep.subr.mxu0 0.0
        %710 = vmatpush1.msra.mxu0 0.0
        %711 = vmatprep.subr.mxu0 0.0
        %712 = vmatpush1.msra.mxu0 0.0
        %713 = vmatprep.subr.mxu0 0.0
        %714 = vmatpush1.msra.mxu0 0.0
        %715 = vmatprep.subr.mxu0 0.0
        %716 = vmatpush1.msra.mxu0 0.0
        %717 = vmatprep.subr.mxu0 0.0
        %718 = vmatpush1.msra.mxu0 0.0
        %719 = vmatprep.mubr.f32.mxu0 0.0
        %720 = vmatmul.mubr.f32.gmra.mrb[0].mxu0 %v631
        %v721 = vpop.f32.mrb[0].mxu0
        %v722 = vadd.f32 0.0, %v721
        %v723 = vpop.f32.mrb[0].mxu0
        %724 = vmatprep.mubr.f32.mxu0 0.0
        %725 = vmatmul.mubr.f32.gmra.mrb[0].mxu0 %v632
        %v726 = vpop.f32.mrb[0].mxu0
        %v727 = vadd.f32 0.0, %v726
        %v728 = vpop.f32.mrb[0].mxu0
        %729 = vdwg.mxu0
        %731 = vset.pattern.permute.xlu0 0
        %732 = vperm.xlu0 %731, %v637
        %v733 = vpop.permute.xlu0 %732
        %736 = vset.pattern.permute.xlu0 0
        %737 = vperm.xlu0 %736, %v638
        %v738 = vpop.permute.xlu0 %737
        %v740 = vmul.f32 %v733, %v722
        %v741 = vmul.f32 %v738, %v727
        %vm742 = vcmask 130048
        %v744 = vsel %vm742, %v635, 0
        %v747 = vsel %vm742, %v636, 0
        %749 = vmatprep.subr.mxu0 0.0
        %750 = vmatpush1.msra.mxu0 %v740
        %751 = vmatprep.subr.mxu0 0.0
        %752 = vmatpush1.msra.mxu0 %v741
        %753 = vmatprep.subr.mxu0 0.0
        %754 = vmatpush1.msra.mxu0 0.0
        %755 = vmatprep.subr.mxu0 0.0
        %756 = vmatpush1.msra.mxu0 0.0
        %757 = vmatprep.subr.mxu0 0.0
        %758 = vmatpush1.msra.mxu0 0.0
        %759 = vmatprep.subr.mxu0 0.0
        %760 = vmatpush1.msra.mxu0 0.0
        %761 = vmatprep.subr.mxu0 0.0
        %762 = vmatpush1.msra.mxu0 0.0
        %763 = vmatprep.subr.mxu0 0.0
        %764 = vmatpush1.msra.mxu0 0.0
        %765 = vmatprep.subr.mxu0 0.0
        %766 = vmatpush1.msra.mxu0 0.0
        %767 = vmatprep.subr.mxu0 0.0
        %768 = vmatpush1.msra.mxu0 0.0
        %769 = vmatprep.subr.mxu0 0.0
        %770 = vmatpush1.msra.mxu0 0.0
        %771 = vmatprep.subr.mxu0 0.0
        %772 = vmatpush1.msra.mxu0 0.0
        %773 = vmatprep.subr.mxu0 0.0
        %774 = vmatpush1.msra.mxu0 0.0
        %775 = vmatprep.subr.mxu0 0.0
        %776 = vmatpush1.msra.mxu0 0.0
        %777 = vmatprep.subr.mxu0 0.0
        %778 = vmatpush1.msra.mxu0 0.0
        %779 = vmatprep.subr.mxu0 0.0
        %780 = vmatpush1.msra.mxu0 0.0
        %781 = vmatprep.subr.mxu0 0.0
        %782 = vmatpush1.msra.mxu0 0.0
        %783 = vmatprep.subr.mxu0 0.0
        %784 = vmatpush1.msra.mxu0 0.0
        %785 = vmatprep.subr.mxu0 0.0
        %786 = vmatpush1.msra.mxu0 0.0
        %787 = vmatprep.subr.mxu0 0.0
        %788 = vmatpush1.msra.mxu0 0.0
        %789 = vmatprep.subr.mxu0 0.0
        %790 = vmatpush1.msra.mxu0 0.0
        %791 = vmatprep.subr.mxu0 0.0
        %792 = vmatpush1.msra.mxu0 0.0
        %793 = vmatprep.subr.mxu0 0.0
        %794 = vmatpush1.msra.mxu0 0.0
        %795 = vmatprep.subr.mxu0 0.0
        %796 = vmatpush1.msra.mxu0 0.0
        %797 = vmatprep.subr.mxu0 0.0
        %798 = vmatpush1.msra.mxu0 0.0
        %799 = vmatprep.subr.mxu0 0.0
        %800 = vmatpush1.msra.mxu0 0.0
        %801 = vmatprep.subr.mxu0 0.0
        %802 = vmatpush1.msra.mxu0 0.0
        %803 = vmatprep.subr.mxu0 0.0
        %804 = vmatpush1.msra.mxu0 0.0
        %805 = vmatprep.subr.mxu0 0.0
        %806 = vmatpush1.msra.mxu0 0.0
        %807 = vmatprep.subr.mxu0 0.0
        %808 = vmatpush1.msra.mxu0 0.0
        %809 = vmatprep.subr.mxu0 0.0
        %810 = vmatpush1.msra.mxu0 0.0
        %811 = vmatprep.subr.mxu0 0.0
        %812 = vmatpush1.msra.mxu0 0.0
        %813 = vmatprep.mubr.f32.mxu0 0.0
        %814 = vmatmul.mubr.f32.gmra.mrb[0].mxu0 %v744
        %v815 = vpop.f32.mrb[0].mxu0
        %v816 = vadd.f32 0.0, %v815
        %v817 = vpop.f32.mrb[0].mxu0
        %818 = vmatprep.mubr.f32.mxu0 0.0
        %819 = vmatmul.mubr.f32.gmra.mrb[0].mxu0 %v747
        %v820 = vpop.f32.mrb[0].mxu0
        %v821 = vadd.f32 0.0, %v820
        %v822 = vpop.f32.mrb[0].mxu0
        %823 = vdwg.mxu0
        %v824 = vmul.f32 %v733, %v816
        %v825 = vmul.f32 %v738, %v821
        %v826 = vmul.f32 %v824, 0.2
        %v827 = vmul.f32 %v825, 0.2
        %v828 = vmax.f32 %v824, %v826
        %v829 = vmax.f32 %v825, %v827
        %830 = vst [vmem:[%s610] sm:$0xff] %v828
        %831 = vst [vmem:[%s610 + $0x8] sm:$0xff] %v829
        %v832 = vld [vmem:[%s529] sm:$0xff]
        %v833 = vld [vmem:[%s529 + $0x8] sm:$0xff]
        %v834 = vld [vmem:[%s625] sm:$0xff]
        %v835 = vld [vmem:[%s625 + $0x8] sm:$0xff]
        %v836 = vld [vmem:[#allocation10] sm:$0xff]
        %v837 = vld [vmem:[#allocation10 + $0x8] sm:$0xff]
        %v838 = vld [vmem:[#allocation10 + $0x10] sm:$0xff]
        %v839 = vld [vmem:[#allocation10 + $0x18] sm:$0xff]
        %v840 = vld [vmem:[#allocation10 + $0x20] sm:$0xff]
        %v841 = vld [vmem:[#allocation10 + $0x28] sm:$0xff]
        %v842 = vld [vmem:[#allocation10 + $0x30] sm:$0xff]
        %v843 = vld [vmem:[#allocation10 + $0x38] sm:$0xff]
        %v844 = vld [vmem:[#allocation10 + $0x40] sm:$0xff]
        %v845 = vld [vmem:[#allocation10 + $0x48] sm:$0xff]
        %v846 = vld [vmem:[#allocation10 + $0x50] sm:$0xff]
        %v847 = vld [vmem:[#allocation10 + $0x58] sm:$0xff]
        %v848 = vld [vmem:[#allocation10 + $0x60] sm:$0xff]
        %v849 = vld [vmem:[#allocation10 + $0x68] sm:$0xff]
        %v850 = vld [vmem:[#allocation10 + $0x70] sm:$0xff]
        %v851 = vld [vmem:[#allocation10 + $0x78] sm:$0xff]
        %852 = vmatprep.subr.mxu0 0.0
        %853 = vmatpush1.msra.mxu0 %v836
        %854 = vmatprep.subr.mxu0 0.0
        %855 = vmatpush1.msra.mxu0 %v837
        %856 = vmatprep.subr.mxu0 0.0
        %857 = vmatpush1.msra.mxu0 %v838
        %858 = vmatprep.subr.mxu0 0.0
        %859 = vmatpush1.msra.mxu0 %v839
        %860 = vmatprep.subr.mxu0 0.0
        %861 = vmatpush1.msra.mxu0 %v840
        %862 = vmatprep.subr.mxu0 0.0
        %863 = vmatpush1.msra.mxu0 %v841
        %864 = vmatprep.subr.mxu0 0.0
        %865 = vmatpush1.msra.mxu0 %v842
        %866 = vmatprep.subr.mxu0 0.0
        %867 = vmatpush1.msra.mxu0 %v843
        %868 = vmatprep.subr.mxu0 0.0
        %869 = vmatpush1.msra.mxu0 %v844
        %870 = vmatprep.subr.mxu0 0.0
        %871 = vmatpush1.msra.mxu0 %v845
        %872 = vmatprep.subr.mxu0 0.0
        %873 = vmatpush1.msra.mxu0 %v846
        %874 = vmatprep.subr.mxu0 0.0
        %875 = vmatpush1.msra.mxu0 %v847
        %876 = vmatprep.subr.mxu0 0.0
        %877 = vmatpush1.msra.mxu0 %v848
        %878 = vmatprep.subr.mxu0 0.0
        %879 = vmatpush1.msra.mxu0 %v849
        %880 = vmatprep.subr.mxu0 0.0
        %881 = vmatpush1.msra.mxu0 %v850
        %882 = vmatprep.subr.mxu0 0.0
        %883 = vmatpush1.msra.mxu0 %v851
        %884 = vmatprep.subr.mxu0 0.0
        %885 = vmatpush1.msra.mxu0 0.0
        %886 = vmatprep.subr.mxu0 0.0
        %887 = vmatpush1.msra.mxu0 0.0
        %888 = vmatprep.subr.mxu0 0.0
        %889 = vmatpush1.msra.mxu0 0.0
        %890 = vmatprep.subr.mxu0 0.0
        %891 = vmatpush1.msra.mxu0 0.0
        %892 = vmatprep.subr.mxu0 0.0
        %893 = vmatpush1.msra.mxu0 0.0
        %894 = vmatprep.subr.mxu0 0.0
        %895 = vmatpush1.msra.mxu0 0.0
        %896 = vmatprep.subr.mxu0 0.0
        %897 = vmatpush1.msra.mxu0 0.0
        %898 = vmatprep.subr.mxu0 0.0
        %899 = vmatpush1.msra.mxu0 0.0
        %900 = vmatprep.subr.mxu0 0.0
        %901 = vmatpush1.msra.mxu0 0.0
        %902 = vmatprep.subr.mxu0 0.0
        %903 = vmatpush1.msra.mxu0 0.0
        %904 = vmatprep.subr.mxu0 0.0
        %905 = vmatpush1.msra.mxu0 0.0
        %906 = vmatprep.subr.mxu0 0.0
        %907 = vmatpush1.msra.mxu0 0.0
        %908 = vmatprep.subr.mxu0 0.0
        %909 = vmatpush1.msra.mxu0 0.0
        %910 = vmatprep.subr.mxu0 0.0
        %911 = vmatpush1.msra.mxu0 0.0
        %912 = vmatprep.subr.mxu0 0.0
        %913 = vmatpush1.msra.mxu0 0.0
        %914 = vmatprep.subr.mxu0 0.0
        %915 = vmatpush1.msra.mxu0 0.0
        %916 = vmatprep.mubr.f32.mxu0 0.0
        %917 = vmatmul.mubr.f32.gmra.mrb[0].mxu0 %v633
        %v918 = vpop.f32.mrb[0].mxu0
        %v919 = vadd.f32 0.0, %v918
        %v920 = vpop.f32.mrb[0].mxu0
        %921 = vmatprep.mubr.f32.mxu0 0.0
        %922 = vmatmul.mubr.f32.gmra.mrb[0].mxu0 %v634
        %v923 = vpop.f32.mrb[0].mxu0
        %v924 = vadd.f32 0.0, %v923
        %v925 = vpop.f32.mrb[0].mxu0
        %926 = vdwg.mxu0
        %928 = vset.pattern.permute.xlu0 0
        %929 = vperm.xlu0 %928, %v834
        %v930 = vpop.permute.xlu0 %929
        %933 = vset.pattern.permute.xlu0 0
        %934 = vperm.xlu0 %933, %v835
        %v935 = vpop.permute.xlu0 %934
        %v937 = vmul.f32 %v930, %v919
        %v938 = vmul.f32 %v935, %v924
        %v940 = vsel %vm742, %v832, 0
        %v943 = vsel %vm742, %v833, 0
        %945 = vmatprep.subr.mxu0 0.0
        %946 = vmatpush1.msra.mxu0 %v937
        %947 = vmatprep.subr.mxu0 0.0
        %948 = vmatpush1.msra.mxu0 %v938
        %949 = vmatprep.subr.mxu0 0.0
        %950 = vmatpush1.msra.mxu0 0.0
        %951 = vmatprep.subr.mxu0 0.0
        %952 = vmatpush1.msra.mxu0 0.0
        %953 = vmatprep.subr.mxu0 0.0
        %954 = vmatpush1.msra.mxu0 0.0
        %955 = vmatprep.subr.mxu0 0.0
        %956 = vmatpush1.msra.mxu0 0.0
        %957 = vmatprep.subr.mxu0 0.0
        %958 = vmatpush1.msra.mxu0 0.0
        %959 = vmatprep.subr.mxu0 0.0
        %960 = vmatpush1.msra.mxu0 0.0
        %961 = vmatprep.subr.mxu0 0.0
        %962 = vmatpush1.msra.mxu0 0.0
        %963 = vmatprep.subr.mxu0 0.0
        %964 = vmatpush1.msra.mxu0 0.0
        %965 = vmatprep.subr.mxu0 0.0
        %966 = vmatpush1.msra.mxu0 0.0
        %967 = vmatprep.subr.mxu0 0.0
        %968 = vmatpush1.msra.mxu0 0.0
        %969 = vmatprep.subr.mxu0 0.0
        %970 = vmatpush1.msra.mxu0 0.0
        %971 = vmatprep.subr.mxu0 0.0
        %972 = vmatpush1.msra.mxu0 0.0
        %973 = vmatprep.subr.mxu0 0.0
        %974 = vmatpush1.msra.mxu0 0.0
        %975 = vmatprep.subr.mxu0 0.0
        %976 = vmatpush1.msra.mxu0 0.0
        %977 = vmatprep.subr.mxu0 0.0
        %978 = vmatpush1.msra.mxu0 0.0
        %979 = vmatprep.subr.mxu0 0.0
        %980 = vmatpush1.msra.mxu0 0.0
        %981 = vmatprep.subr.mxu0 0.0
        %982 = vmatpush1.msra.mxu0 0.0
        %983 = vmatprep.subr.mxu0 0.0
        %984 = vmatpush1.msra.mxu0 0.0
        %985 = vmatprep.subr.mxu0 0.0
        %986 = vmatpush1.msra.mxu0 0.0
        %987 = vmatprep.subr.mxu0 0.0
        %988 = vmatpush1.msra.mxu0 0.0
        %989 = vmatprep.subr.mxu0 0.0
        %990 = vmatpush1.msra.mxu0 0.0
        %991 = vmatprep.subr.mxu0 0.0
        %992 = vmatpush1.msra.mxu0 0.0
        %993 = vmatprep.subr.mxu0 0.0
        %994 = vmatpush1.msra.mxu0 0.0
        %995 = vmatprep.subr.mxu0 0.0
        %996 = vmatpush1.msra.mxu0 0.0
        %997 = vmatprep.subr.mxu0 0.0
        %998 = vmatpush1.msra.mxu0 0.0
        %999 = vmatprep.subr.mxu0 0.0
        %1000 = vmatpush1.msra.mxu0 0.0
        %1001 = vmatprep.subr.mxu0 0.0
        %1002 = vmatpush1.msra.mxu0 0.0
        %1003 = vmatprep.subr.mxu0 0.0
        %1004 = vmatpush1.msra.mxu0 0.0
        %1005 = vmatprep.subr.mxu0 0.0
        %1006 = vmatpush1.msra.mxu0 0.0
        %1007 = vmatprep.subr.mxu0 0.0
        %1008 = vmatpush1.msra.mxu0 0.0
        %1009 = vmatprep.mubr.f32.mxu0 0.0
        %1010 = vmatmul.mubr.f32.gmra.mrb[0].mxu0 %v940
        %v1011 = vpop.f32.mrb[0].mxu0
        %v1012 = vadd.f32 0.0, %v1011
        %v1013 = vpop.f32.mrb[0].mxu0
        %1014 = vmatprep.mubr.f32.mxu0 0.0
        %1015 = vmatmul.mubr.f32.gmra.mrb[0].mxu0 %v943
        %v1016 = vpop.f32.mrb[0].mxu0
        %v1017 = vadd.f32 0.0, %v1016
        %v1018 = vpop.f32.mrb[0].mxu0
        %1019 = vdwg.mxu0
        %v1020 = vmul.f32 %v930, %v1012
        %v1021 = vmul.f32 %v935, %v1017
        %v1022 = vmul.f32 %v1020, 0.2
        %v1023 = vmul.f32 %v1021, 0.2
        %v1024 = vmax.f32 %v1020, %v1022
        %v1025 = vmax.f32 %v1021, %v1023
        %1026 = vst [vmem:[%s610 + $0x10] sm:$0xff] %v1024
        %1027 = vst [vmem:[%s610 + $0x18] sm:$0xff] %v1025
        %v1028 = vld [vmem:[%s615] sm:$0xff]
        %v1029 = vld [vmem:[%s615 + $0x8] sm:$0xff]
        %v1030 = vld [vmem:[%s615 + $0x10] sm:$0xff]
        %v1031 = vld [vmem:[%s615 + $0x18] sm:$0xff]
        %v1032 = vld [vmem:[%s630] sm:$0xff]
        %v1033 = vld [vmem:[%s630 + $0x8] sm:$0xff]
        %v1034 = vld [vmem:[%s630 + $0x10] sm:$0xff]
        %v1035 = vld [vmem:[%s630 + $0x18] sm:$0xff]
        %v1036 = vld [vmem:[%s610] sm:$0xff]
        %v1037 = vld [vmem:[%s610 + $0x8] sm:$0xff]
        %v1038 = vld [vmem:[%s610 + $0x10] sm:$0xff]
        %v1039 = vld [vmem:[%s610 + $0x18] sm:$0xff]
        %v1040 = vld [vmem:[#allocation11] sm:$0xff]
        %v1041 = vld [vmem:[#allocation11 + $0x8] sm:$0xff]
        %v1042 = vld [vmem:[#allocation11 + $0x10] sm:$0xff]
        %v1043 = vld [vmem:[#allocation11 + $0x18] sm:$0xff]
        %v1044 = vld [vmem:[#allocation11 + $0x20] sm:$0xff]
        %v1045 = vld [vmem:[#allocation11 + $0x28] sm:$0xff]
        %v1046 = vld [vmem:[#allocation11 + $0x30] sm:$0xff]
        %v1047 = vld [vmem:[#allocation11 + $0x38] sm:$0xff]
        %v1048 = vld [vmem:[#allocation11 + $0x40] sm:$0xff]
        %v1049 = vld [vmem:[#allocation11 + $0x48] sm:$0xff]
        %v1050 = vld [vmem:[#allocation11 + $0x50] sm:$0xff]
        %v1051 = vld [vmem:[#allocation11 + $0x58] sm:$0xff]
        %v1052 = vld [vmem:[#allocation11 + $0x60] sm:$0xff]
        %v1053 = vld [vmem:[#allocation11 + $0x68] sm:$0xff]
        %v1054 = vld [vmem:[#allocation11 + $0x70] sm:$0xff]
        %v1055 = vld [vmem:[#allocation11 + $0x78] sm:$0xff]
        %1056 = vmatprep.subr.mxu0 0.0
        %1057 = vmatpush1.msra.mxu0 %v1040
        %1058 = vmatprep.subr.mxu0 0.0
        %1059 = vmatpush1.msra.mxu0 %v1041
        %1060 = vmatprep.subr.mxu0 0.0
        %1061 = vmatpush1.msra.mxu0 %v1042
        %1062 = vmatprep.subr.mxu0 0.0
        %1063 = vmatpush1.msra.mxu0 %v1043
        %1064 = vmatprep.subr.mxu0 0.0
        %1065 = vmatpush1.msra.mxu0 %v1044
        %1066 = vmatprep.subr.mxu0 0.0
        %1067 = vmatpush1.msra.mxu0 %v1045
        %1068 = vmatprep.subr.mxu0 0.0
        %1069 = vmatpush1.msra.mxu0 %v1046
        %1070 = vmatprep.subr.mxu0 0.0
        %1071 = vmatpush1.msra.mxu0 %v1047
        %1072 = vmatprep.subr.mxu0 0.0
        %1073 = vmatpush1.msra.mxu0 %v1048
        %1074 = vmatprep.subr.mxu0 0.0
        %1075 = vmatpush1.msra.mxu0 %v1049
        %1076 = vmatprep.subr.mxu0 0.0
        %1077 = vmatpush1.msra.mxu0 %v1050
        %1078 = vmatprep.subr.mxu0 0.0
        %1079 = vmatpush1.msra.mxu0 %v1051
        %1080 = vmatprep.subr.mxu0 0.0
        %1081 = vmatpush1.msra.mxu0 %v1052
        %1082 = vmatprep.subr.mxu0 0.0
        %1083 = vmatpush1.msra.mxu0 %v1053
        %1084 = vmatprep.subr.mxu0 0.0
        %1085 = vmatpush1.msra.mxu0 %v1054
        %1086 = vmatprep.subr.mxu0 0.0
        %1087 = vmatpush1.msra.mxu0 %v1055
        %1088 = vmatprep.subr.mxu0 0.0
        %1089 = vmatpush1.msra.mxu0 0.0
        %1090 = vmatprep.subr.mxu0 0.0
        %1091 = vmatpush1.msra.mxu0 0.0
        %1092 = vmatprep.subr.mxu0 0.0
        %1093 = vmatpush1.msra.mxu0 0.0
        %1094 = vmatprep.subr.mxu0 0.0
        %1095 = vmatpush1.msra.mxu0 0.0
        %1096 = vmatprep.subr.mxu0 0.0
        %1097 = vmatpush1.msra.mxu0 0.0
        %1098 = vmatprep.subr.mxu0 0.0
        %1099 = vmatpush1.msra.mxu0 0.0
        %1100 = vmatprep.subr.mxu0 0.0
        %1101 = vmatpush1.msra.mxu0 0.0
        %1102 = vmatprep.subr.mxu0 0.0
        %1103 = vmatpush1.msra.mxu0 0.0
        %1104 = vmatprep.subr.mxu0 0.0
        %1105 = vmatpush1.msra.mxu0 0.0
        %1106 = vmatprep.subr.mxu0 0.0
        %1107 = vmatpush1.msra.mxu0 0.0
        %1108 = vmatprep.subr.mxu0 0.0
        %1109 = vmatpush1.msra.mxu0 0.0
        %1110 = vmatprep.subr.mxu0 0.0
        %1111 = vmatpush1.msra.mxu0 0.0
        %1112 = vmatprep.subr.mxu0 0.0
        %1113 = vmatpush1.msra.mxu0 0.0
        %1114 = vmatprep.subr.mxu0 0.0
        %1115 = vmatpush1.msra.mxu0 0.0
        %1116 = vmatprep.subr.mxu0 0.0
        %1117 = vmatpush1.msra.mxu0 0.0
        %1118 = vmatprep.subr.mxu0 0.0
        %1119 = vmatpush1.msra.mxu0 0.0
        %1120 = vmatprep.mubr.f32.mxu0 0.0
        %1121 = vmatmul.mubr.f32.gmra.mrb[0].mxu0 %v1036
        %v1122 = vpop.f32.mrb[0].mxu0
        %v1123 = vadd.f32 0.0, %v1122
        %v1124 = vpop.f32.mrb[0].mxu0
        %1125 = vmatprep.mubr.f32.mxu0 0.0
        %1126 = vmatmul.mubr.f32.gmra.mrb[0].mxu0 %v1037
        %v1127 = vpop.f32.mrb[0].mxu0
        %v1128 = vadd.f32 0.0, %v1127
        %v1129 = vpop.f32.mrb[0].mxu0
        %1130 = vmatprep.mubr.f32.mxu0 0.0
        %1131 = vmatmul.mubr.f32.gmra.mrb[0].mxu0 %v1038
        %v1132 = vpop.f32.mrb[0].mxu0
        %v1133 = vadd.f32 0.0, %v1132
        %v1134 = vpop.f32.mrb[0].mxu0
        %1135 = vmatprep.mubr.f32.mxu0 0.0
        %1136 = vmatmul.mubr.f32.gmra.mrb[0].mxu0 %v1039
        %v1137 = vpop.f32.mrb[0].mxu0
        %v1138 = vadd.f32 0.0, %v1137
        %v1139 = vpop.f32.mrb[0].mxu0
        %1140 = vdwg.mxu0
        %1142 = vset.pattern.permute.xlu0 0
        %1143 = vperm.xlu0 %1142, %v1032
        %v1144 = vpop.permute.xlu0 %1143
        %1147 = vset.pattern.permute.xlu0 0
        %1148 = vperm.xlu0 %1147, %v1033
        %v1149 = vpop.permute.xlu0 %1148
        %1152 = vset.pattern.permute.xlu0 0
        %1153 = vperm.xlu0 %1152, %v1034
        %v1154 = vpop.permute.xlu0 %1153
        %1157 = vset.pattern.permute.xlu0 0
        %1158 = vperm.xlu0 %1157, %v1035
        %v1159 = vpop.permute.xlu0 %1158
        %v1161 = vmul.f32 %v1144, %v1123
        %v1162 = vmul.f32 %v1149, %v1128
        %v1163 = vmul.f32 %v1154, %v1133
        %v1164 = vmul.f32 %v1159, %v1138
        %vm1165 = vcmask 261120
        %v1167 = vsel %vm1165, %v1028, 0
        %v1170 = vsel %vm1165, %v1029, 0
        %v1173 = vsel %vm1165, %v1030, 0
        %v1176 = vsel %vm1165, %v1031, 0
        %1178 = vmatprep.subr.mxu0 0.0
        %1179 = vmatpush1.msra.mxu0 %v1161
        %1180 = vmatprep.subr.mxu0 0.0
        %1181 = vmatpush1.msra.mxu0 %v1162
        %1182 = vmatprep.subr.mxu0 0.0
        %1183 = vmatpush1.msra.mxu0 %v1163
        %1184 = vmatprep.subr.mxu0 0.0
        %1185 = vmatpush1.msra.mxu0 %v1164
        %1186 = vmatprep.subr.mxu0 0.0
        %1187 = vmatpush1.msra.mxu0 0.0
        %1188 = vmatprep.subr.mxu0 0.0
        %1189 = vmatpush1.msra.mxu0 0.0
        %1190 = vmatprep.subr.mxu0 0.0
        %1191 = vmatpush1.msra.mxu0 0.0
        %1192 = vmatprep.subr.mxu0 0.0
        %1193 = vmatpush1.msra.mxu0 0.0
        %1194 = vmatprep.subr.mxu0 0.0
        %1195 = vmatpush1.msra.mxu0 0.0
        %1196 = vmatprep.subr.mxu0 0.0
        %1197 = vmatpush1.msra.mxu0 0.0
        %1198 = vmatprep.subr.mxu0 0.0
        %1199 = vmatpush1.msra.mxu0 0.0
        %1200 = vmatprep.subr.mxu0 0.0
        %1201 = vmatpush1.msra.mxu0 0.0
        %1202 = vmatprep.subr.mxu0 0.0
        %1203 = vmatpush1.msra.mxu0 0.0
        %1204 = vmatprep.subr.mxu0 0.0
        %1205 = vmatpush1.msra.mxu0 0.0
        %1206 = vmatprep.subr.mxu0 0.0
        %1207 = vmatpush1.msra.mxu0 0.0
        %1208 = vmatprep.subr.mxu0 0.0
        %1209 = vmatpush1.msra.mxu0 0.0
        %1210 = vmatprep.subr.mxu0 0.0
        %1211 = vmatpush1.msra.mxu0 0.0
        %1212 = vmatprep.subr.mxu0 0.0
        %1213 = vmatpush1.msra.mxu0 0.0
        %1214 = vmatprep.subr.mxu0 0.0
        %1215 = vmatpush1.msra.mxu0 0.0
        %1216 = vmatprep.subr.mxu0 0.0
        %1217 = vmatpush1.msra.mxu0 0.0
        %1218 = vmatprep.subr.mxu0 0.0
        %1219 = vmatpush1.msra.mxu0 0.0
        %1220 = vmatprep.subr.mxu0 0.0
        %1221 = vmatpush1.msra.mxu0 0.0
        %1222 = vmatprep.subr.mxu0 0.0
        %1223 = vmatpush1.msra.mxu0 0.0
        %1224 = vmatprep.subr.mxu0 0.0
        %1225 = vmatpush1.msra.mxu0 0.0
        %1226 = vmatprep.subr.mxu0 0.0
        %1227 = vmatpush1.msra.mxu0 0.0
        %1228 = vmatprep.subr.mxu0 0.0
        %1229 = vmatpush1.msra.mxu0 0.0
        %1230 = vmatprep.subr.mxu0 0.0
        %1231 = vmatpush1.msra.mxu0 0.0
        %1232 = vmatprep.subr.mxu0 0.0
        %1233 = vmatpush1.msra.mxu0 0.0
        %1234 = vmatprep.subr.mxu0 0.0
        %1235 = vmatpush1.msra.mxu0 0.0
        %1236 = vmatprep.subr.mxu0 0.0
        %1237 = vmatpush1.msra.mxu0 0.0
        %1238 = vmatprep.subr.mxu0 0.0
        %1239 = vmatpush1.msra.mxu0 0.0
        %1240 = vmatprep.subr.mxu0 0.0
        %1241 = vmatpush1.msra.mxu0 0.0
        %1242 = vmatprep.mubr.f32.mxu0 0.0
        %1243 = vmatmul.mubr.f32.gmra.mrb[0].mxu0 %v1167
        %v1244 = vpop.f32.mrb[0].mxu0
        %v1245 = vadd.f32 0.0, %v1244
        %v1246 = vpop.f32.mrb[0].mxu0
        %1247 = vmatprep.mubr.f32.mxu0 0.0
        %1248 = vmatmul.mubr.f32.gmra.mrb[0].mxu0 %v1170
        %v1249 = vpop.f32.mrb[0].mxu0
        %v1250 = vadd.f32 0.0, %v1249
        %v1251 = vpop.f32.mrb[0].mxu0
        %1252 = vmatprep.mubr.f32.mxu0 0.0
        %1253 = vmatmul.mubr.f32.gmra.mrb[0].mxu0 %v1173
        %v1254 = vpop.f32.mrb[0].mxu0
        %v1255 = vadd.f32 0.0, %v1254
        %v1256 = vpop.f32.mrb[0].mxu0
        %1257 = vmatprep.mubr.f32.mxu0 0.0
        %1258 = vmatmul.mubr.f32.gmra.mrb[0].mxu0 %v1176
        %v1259 = vpop.f32.mrb[0].mxu0
        %v1260 = vadd.f32 0.0, %v1259
        %v1261 = vpop.f32.mrb[0].mxu0
        %1262 = vdwg.mxu0
        %v1263 = vmul.f32 %v1144, %v1245
        %v1264 = vmul.f32 %v1149, %v1250
        %v1265 = vmul.f32 %v1154, %v1255
        %v1266 = vmul.f32 %v1159, %v1260
        %v1267 = vmul.f32 %v1263, 0.2
        %v1268 = vmul.f32 %v1264, 0.2
        %v1269 = vmul.f32 %v1265, 0.2
        %v1270 = vmul.f32 %v1266, 0.2
        %v1271 = vmax.f32 %v1263, %v1267
        %v1272 = vmax.f32 %v1264, %v1268
        %v1273 = vmax.f32 %v1265, %v1269
        %v1274 = vmax.f32 %v1266, %v1270
        %v1275 = vadd.f32 %v631, %v1271
        %v1276 = vadd.f32 %v632, %v1272
        %v1277 = vmul.f32 %v1275, %v1275
        %v1278 = vmul.f32 %v1276, %v1276
        %1279 = vadd.xlane.f32.xlu0 %v1277
        %v1280 = vpop.xlane.xlu0 %1279
        %1281 = vadd.xlane.f32.xlu0 %v1278
        %v1282 = vpop.xlane.xlu0 %1281
        %v1283 = vrsqrt.pop %v1280
        %v1284 = vmul.f32 %v1280, %v1283
        %vm1285 = vcmp.eq.f32.partialorder %v1280, inf
        %v1286 = vsel %vm1285, %v1280, %v1284
        %vm1287 = vcmp.eq.f32.partialorder %v1280, 0.0
        %v1288 = vand.u32 %v1280, 2147483648
        %v1289 = vsel %vm1287, %v1288, %v1286
        %v1290 = vrsqrt.pop %v1282
        %v1291 = vmul.f32 %v1282, %v1290
        %vm1292 = vcmp.eq.f32.partialorder %v1282, inf
        %v1293 = vsel %vm1292, %v1282, %v1291
        %vm1294 = vcmp.eq.f32.partialorder %v1282, 0.0
        %v1295 = vand.u32 %v1282, 2147483648
        %v1296 = vsel %vm1294, %v1295, %v1293
        %v1297 = vadd.f32 %v1289, 1e-12
        %v1298 = vadd.f32 %v1296, 1e-12
        %v1299 = vrcp.pop %v1297
        %v1300 = vmul.f32 %v1275, %v1299
        %v1301 = vrcp.pop %v1298
        %v1302 = vmul.f32 %v1276, %v1301
        %1303 = vst [vmem:[%s610] sm:$0xff] %v1300
        %1304 = vst [vmem:[%s610 + $0x8] sm:$0xff] %v1302
        %v1305 = vadd.f32 %v633, %v1273
        %v1306 = vadd.f32 %v634, %v1274
        %v1307 = vmul.f32 %v1305, %v1305
        %v1308 = vmul.f32 %v1306, %v1306
        %1309 = vadd.xlane.f32.xlu0 %v1307
        %v1310 = vpop.xlane.xlu0 %1309
        %1311 = vadd.xlane.f32.xlu0 %v1308
        %v1312 = vpop.xlane.xlu0 %1311
        %v1313 = vrsqrt.pop %v1310
        %v1314 = vmul.f32 %v1310, %v1313
        %vm1315 = vcmp.eq.f32.partialorder %v1310, inf
        %v1316 = vsel %vm1315, %v1310, %v1314
        %vm1317 = vcmp.eq.f32.partialorder %v1310, 0.0
        %v1318 = vand.u32 %v1310, 2147483648
        %v1319 = vsel %vm1317, %v1318, %v1316
        %v1320 = vrsqrt.pop %v1312
        %v1321 = vmul.f32 %v1312, %v1320
        %vm1322 = vcmp.eq.f32.partialorder %v1312, inf
        %v1323 = vsel %vm1322, %v1312, %v1321
        %vm1324 = vcmp.eq.f32.partialorder %v1312, 0.0
        %v1325 = vand.u32 %v1312, 2147483648
        %v1326 = vsel %vm1324, %v1325, %v1323
        %v1327 = vadd.f32 %v1319, 1e-12
        %v1328 = vadd.f32 %v1326, 1e-12
        %v1329 = vrcp.pop %v1327
        %v1330 = vmul.f32 %v1305, %v1329
        %v1331 = vrcp.pop %v1328
        %v1332 = vmul.f32 %v1306, %v1331
        %1333 = vst [vmem:[%s610 + $0x10] sm:$0xff] %v1330
        %1334 = vst [vmem:[%s610 + $0x18] sm:$0xff] %v1332
        %s1335 = sand.u32 %s314, 1
        %s1336 = scalar_lea.sflag [#allocation4], %s1335
        %s1337 = sand.u32 %s314, 1
        %s1338 = smul.addr %s1337, 32
        %s1339 = scalar_lea.vmem [#allocation13], %s1338
        // Predicated region
        $region89: #{tpu_custom_call.1} parent=63 // pred_check
          %p1340 = pneg %p324
        $region90: #{tpu_custom_call.1} parent=63 // pred_check_branch
          %1342 = sbr.rel (%p1340) target = $region92
        $region91: #{tpu_custom_call.1} parent=63 // pred_region
          %s1344 = ssub.s32 512, 512
          %1345 = vsyncadd %s1336, %s1344
          %s1346 = smul.addr %s35, 4
          %s1347 = smul.addr %s1346, 128
          %s1348 = scalar_lea.hbm %s11, %s1347
          %s1349 = sshll.u32 %s1339, 4
          %s1350 = int_to_ptr.vmem [resolvable:$true] %s1349
          %1355 = dma.vmem_to_hbm [thread:$0]  %s1350, 512, %s1348, %s1336, 128, 128, 8
        $region92: #{tpu_custom_call.1} parent=63 // pred_fallthru
          _
      $region64: #{tpu_custom_call.1} parent=5 // pred_fallthru
        _
      %p1356 = scmp.le.s32.totalorder 2, %s30
      // Predicated region
      $region93: #{tpu_custom_call.1} parent=5 // pred_check
        %p1357 = pneg %p1356
      $region94: #{tpu_custom_call.1} parent=5 // pred_check_branch
        %1359 = sbr.rel (%p1357) target = $region96
      $region95: #{tpu_custom_call.1} parent=5 // pred_region
        %s1360 = ssub.s32 %s30, 2
        // Predicated region
        $region97: #{tpu_custom_call.1} parent=95 // pred_check
          %p1361 = pneg %p330
        $region98: #{tpu_custom_call.1} parent=95 // pred_check_branch
          %1363 = sbr.rel (%p1361) target = $region100
        $region99: #{tpu_custom_call.1} parent=95 // pred_region
          %s1364 = sand.u32 %s315, 1
          %s1365 = scalar_lea.sflag [#allocation4], %s1364
          %s1366 = sand.u32 %s315, 1
          %s1367 = smul.addr %s1366, 32
          %s1368 = scalar_lea.vmem [#allocation13], %s1367
          %1369 = dma.done %s1365, 512
        $region100: #{tpu_custom_call.1} parent=95 // pred_fallthru
          _
      $region96: #{tpu_custom_call.1} parent=5 // pred_fallthru
        _
    $region6: #{tpu_custom_call.1} parent=1 // loop_footer
      %s34 = sadd.s32 1, %s30
    $region7: #{tpu_custom_call.1} parent=1 // loop_footer_branch
      %29 = sbr.rel target = $region3
    $region8: #{tpu_custom_call.1} parent=1 // loop_exit
      _
    %1370 = vsyncpa [#allocation3], 1
    %s1371 = scalar_lea.sflag [#allocation3], 1
    %1372 = vsyncpa %s1371, 1
    %1373 = vsyncpa [#allocation6], 1
    %s1374 = scalar_lea.sflag [#allocation6], 1
    %1375 = vsyncpa %s1374, 1
    %1376 = vsyncpa [#allocation9], 1
    %s1377 = scalar_lea.sflag [#allocation9], 1
    %1378 = vsyncpa %s1377, 1
    %1379 = vsyncpa [#allocation12], 1
    %1380 = vsyncpa [#allocation4], 1
    %s1381 = scalar_lea.sflag [#allocation4], 1
    %1382 = vsyncpa %s1381, 1

</llo_original>
